<compile_context>
chip_gen: v6e
topology: v6e:2x2x1
jax: 0.10.0
libtpu: 0.0.40
codegen_flags: <defaults>
</compile_context>

<pallas_src>
import functools
import math

import jax
import jax.numpy as jnp
from jax import lax
from jax.experimental import pallas as pl
from jax.experimental.pallas import tpu as pltpu

_INV_SQRT2 = 1.0 / math.sqrt(2.0)


# ----------------------------------------------------------------------------- hw-aware knobs
@functools.lru_cache(maxsize=None)
def _vmem_budget_bytes():
    cap = 64 * 1024 * 1024
    try:
        cap = int(pltpu.get_tpu_info().vmem_capacity_bytes)
    except Exception:
        pass
    # leave ~25% headroom for compiler-internal scratch / double buffering
    return max(32 * 1024 * 1024, min(cap * 3 // 4, 112 * 1024 * 1024))


@functools.lru_cache(maxsize=None)
def _default_row_tile():
    # 512 rows when we have >=~96 MiB of VMEM budget (v5e/v6e), 256 on v7x (64 MiB physical)
    return 512 if _vmem_budget_bytes() >= 80 * 1024 * 1024 else 256


def _round_up(n, m):
    return ((n + m - 1) // m) * m


def _dot_t(x, w):
    """x[..., K] @ w[N_out, K]^T (PyTorch Linear layout), f32 accumulation, DEFAULT precision."""
    return lax.dot_general(x, w, (((x.ndim - 1,), (1,)), ((), ())),
                           preferred_element_type=jnp.float32)


# ----------------------------------------------------------------------------- kernel A: attention block
def _attention_block_kernel(mask_ref, x_ref, wqkv_ref, bqkv_ref, wo_ref, bo_ref,
                            g_ref, be_ref, o_ref, ctx_ref,
                            *, num_heads, max_v_len, scale, eps):
    # mask_ref: (1,1,L)  x_ref/o_ref: (1,L,D)  wqkv: (3D,D)  bqkv: (1,3D)
    # wo: (D,D)  bo/g/be: (1,D)  ctx_ref (scratch): (L,D)
    x = x_ref[0]                                                    # (L, D), native dtype
    L, D = x.shape
    dh = D // num_heads

    # Single packed QKV projection (one MXU call), f32 accumulate.
    qkv = _dot_t(x, wqkv_ref[...]) + bqkv_ref[...].astype(jnp.float32)      # (L, 3D)
    q = (qkv[:, :D] * scale).astype(x.dtype)                        # fold 1/sqrt(dh) into q
    k = qkv[:, D:2 * D].astype(x.dtype)
    v = qkv[:, 2 * D:].astype(x.dtype)

    # Shifted pad-mask bias built in-kernel (no (B, L, L) mask streamed from HBM).
    qi = lax.broadcasted_iota(jnp.int32, (L, L), 0)
    ki = lax.broadcasted_iota(jnp.int32, (L, L), 1)
    vis = jnp.where((ki < max_v_len) | ((qi >= max_v_len) & (ki <= qi)), 1.0, 0.0)
    pad = mask_ref[0].astype(jnp.float32)                           # (1, L) -> broadcast rows
    bias = (1.0 - vis * pad) * -10000.0                             # (L, L) f32

    # Per-head attention; each head's live range closes after its context is stored.
    for h in range(num_heads):
        lo, hi = h * dh, (h + 1) * dh
        s = lax.dot_general(q[:, lo:hi], k[:, lo:hi], (((1,), (1,)), ((), ())),
                            preferred_element_type=jnp.float32) + bias      # (L, L)
        s = s - jnp.max(s, axis=-1, keepdims=True)
        p = jnp.exp(s)
        p = p * pl.reciprocal(jnp.sum(p, axis=-1, keepdims=True), approx=True)
        ctx = lax.dot_general(p.astype(x.dtype), v[:, lo:hi], (((1,), (0,)), ((), ())),
                              preferred_element_type=jnp.float32)           # (L, dh)
        ctx_ref[:, lo:hi] = ctx.astype(ctx_ref.dtype)

    # Fused BertSelfOutput: dense + residual + LayerNorm (two-pass stats, all f32).
    y = _dot_t(ctx_ref[...], wo_ref[...]) + bo_ref[...].astype(jnp.float32) \
        + x.astype(jnp.float32)
    u = jnp.mean(y, axis=-1, keepdims=True)
    d = y - u
    var = jnp.mean(d * d, axis=-1, keepdims=True)
    normed = d * lax.rsqrt(var + eps)
    o_ref[0] = (g_ref[...].astype(jnp.float32) * normed
                + be_ref[...].astype(jnp.float32)).astype(o_ref.dtype)


def attention_block(x, attention_mask, wqkv, bqkv, wo, bo, gamma, beta, *,
                    num_heads, max_v_len, eps):
    B, L, D = x.shape
    assert D % num_heads == 0
    scale = 1.0 / math.sqrt(D // num_heads)
    mask3 = attention_mask.astype(jnp.float32).reshape(B, 1, L)
    resident = lambda b: (0, 0)
    kernel = functools.partial(_attention_block_kernel, num_heads=num_heads,
                               max_v_len=max_v_len, scale=scale, eps=eps)
    return pl.pallas_call(
        kernel,
        out_shape=jax.ShapeDtypeStruct((B, L, D), x.dtype),
        grid_spec=pltpu.PrefetchScalarGridSpec(
            num_scalar_prefetch=0,
            grid=(B,),
            in_specs=[
                pl.BlockSpec((1, 1, L), lambda b: (b, 0, 0)),   # pad mask row
                pl.BlockSpec((1, L, D), lambda b: (b, 0, 0)),   # hidden states (per batch)
                pl.BlockSpec((3 * D, D), resident),             # packed Wqkv (PyTorch (out,in))
                pl.BlockSpec((1, 3 * D), resident),             # packed bias
                pl.BlockSpec((D, D), resident),                 # Wo (self-output dense)
                pl.BlockSpec((1, D), resident),                 # bo
                pl.BlockSpec((1, D), resident),                 # LN gamma
                pl.BlockSpec((1, D), resident),                 # LN beta
            ],
            out_specs=pl.BlockSpec((1, L, D), lambda b: (b, 0, 0)),
            scratch_shapes=[pltpu.VMEM((L, D), x.dtype)],
        ),
        compiler_params=pltpu.CompilerParams(
            dimension_semantics=("parallel",),
            vmem_limit_bytes=_vmem_budget_bytes()),
    )(mask3, x, wqkv, bqkv.reshape(1, 3 * D), wo, bo.reshape(1, D),
      gamma.reshape(1, D), beta.reshape(1, D))


# ----------------------------------------------------------------------------- kernel B: fused FFN
def _ffn_kernel(x_ref, wi_ref, bi_ref, wo_ref, bo_ref, g_ref, be_ref, o_ref, *, eps):
    # x_ref/o_ref: (tm, H)  wi: (I, H)  bi: (1, I)  wo: (H, I)  bo/g/be: (1, H)
    x = x_ref[...]
    h1 = _dot_t(x, wi_ref[...]) + bi_ref[...].astype(jnp.float32)           # (tm, I) f32
    h1 = h1 * 0.5 * (1.0 + lax.erf(h1 * _INV_SQRT2))                        # exact erf-gelu
    y = _dot_t(h1.astype(x.dtype), wo_ref[...]) + bo_ref[...].astype(jnp.float32) \
        + x.astype(jnp.float32)
    u = jnp.mean(y, axis=-1, keepdims=True)                                 # two-pass LN, f32
    d = y - u
    var = jnp.mean(d * d, axis=-1, keepdims=True)
    normed = d * lax.rsqrt(var + eps)
    o_ref[...] = (g_ref[...].astype(jnp.float32) * normed
                  + be_ref[...].astype(jnp.float32)).astype(o_ref.dtype)


def ffn_block(x, wi, bi, wo, bo, gamma, beta, *, eps, row_tile=None):
    B, S, H = x.shape
    I = wi.shape[0]
    N = B * S
    if row_tile is None:
        row_tile = _default_row_tile()
    tm = max(8, min(row_tile, _round_up(N, 8)))
    x2 = x.reshape(N, H)
    resident = lambda i: (0, 0)
    out = pl.pallas_call(
        functools.partial(_ffn_kernel, eps=eps),
        out_shape=jax.ShapeDtypeStruct((N, H), x.dtype),
        grid_spec=pltpu.PrefetchScalarGridSpec(
            num_scalar_prefetch=0,
            grid=(pl.cdiv(N, tm),),                      # tail handled by Pallas OOB masking
            in_specs=[
                pl.BlockSpec((tm, H), lambda i: (i, 0)),   # rows (dense input == residual)
                pl.BlockSpec((I, H), resident),            # intermediate weight
                pl.BlockSpec((1, I), resident),            # intermediate bias
                pl.BlockSpec((H, I), resident),            # output weight
                pl.BlockSpec((1, H), resident),            # output bias
                pl.BlockSpec((1, H), resident),            # LN gamma
                pl.BlockSpec((1, H), resident),            # LN beta
            ],
            out_specs=pl.BlockSpec((tm, H), lambda i: (i, 0)),
        ),
        compiler_params=pltpu.CompilerParams(
            dimension_semantics=("parallel",),
            vmem_limit_bytes=_vmem_budget_bytes()),
    )(x2, wi, bi.reshape(1, I), wo, bo.reshape(1, H),
      gamma.reshape(1, H), beta.reshape(1, H))
    return out.reshape(B, S, H)


# ----------------------------------------------------------------------------- mask (plain JAX, reference only)
def make_pad_shifted_mask(input_mask, max_v_len, max_t_len, memory_len=0):
    bsz, seq_len = input_mask.shape
    assert max_v_len + max_t_len + memory_len == seq_len
    shifted = jnp.zeros((bsz, max_v_len + max_t_len, seq_len), dtype=input_mask.dtype)
    shifted = shifted.at[:, :, :memory_len + max_v_len].set(1)
    tril = jnp.tril(jnp.ones((max_t_len, max_t_len), dtype=input_mask.dtype))
    shifted = shifted.at[:, max_v_len:, memory_len + max_v_len:].set(tril)
    return shifted * input_mask[:, None, :]


# ----------------------------------------------------------------------------- full layer forward
def bert_layer_no_memory(hidden_states, attention_mask, params, *,
                         max_v_len, max_t_len, num_heads, eps=1e-12,
                         row_tile=None, deterministic=True):
    """Forward of BertLayerNoMemory. hidden_states: (B, L, D); attention_mask: (B, L)."""
    if not deterministic:
        # TODO(synk): training-mode dropout (attention_probs / hidden dropout) not implemented.
        raise NotImplementedError("only inference (deterministic) mode is supported")
    B, L, D = hidden_states.shape
    assert max_v_len + max_t_len == L

    wqkv = jnp.concatenate([params["wq"], params["wk"], params["wv"]], axis=0)   # (3D, D)
    bqkv = jnp.concatenate([params["bq"], params["bk"], params["bv"]], axis=0)   # (3D,)

    att = attention_block(hidden_states, attention_mask, wqkv, bqkv,
                          params["wo1"], params["bo1"], params["g1"], params["be1"],
                          num_heads=num_heads, max_v_len=max_v_len, eps=eps)
    out = ffn_block(att, params["wi"], params["bi"], params["wo2"], params["bo2"],
                    params["g2"], params["be2"], eps=eps, row_tile=row_tile)
    return out


# ----------------------------------------------------------------------------- pure-JAX reference
def _reference_layer(hidden_states, attention_mask, params, *, max_v_len, max_t_len,
                     num_heads, eps):
    mask = make_pad_shifted_mask(attention_mask, max_v_len, max_t_len)
    x = hidden_states
    B, L, D = x.shape
    dh = D // num_heads

    def lin(a, w, b):
        return jnp.einsum("...k,ok->...o", a, w) + b

    def split(a):
        return a.reshape(B, L, num_heads, dh).transpose(0, 2, 1, 3)

    q, k, v = (split(lin(x, params[w], params[b]))
               for w, b in (("wq", "bq"), ("wk", "bk"), ("wv", "bv")))
    bias = (1.0 - mask[:, None, :, :]) * -10000.0
    scores = jnp.einsum("bhqd,bhkd->bhqk", q, k) / math.sqrt(dh) + bias
    probs = jax.nn.softmax(scores, axis=-1)
    ctx = jnp.einsum("bhqk,bhkd->bhqd", probs, v)
    ctx = ctx.transpose(0, 2, 1, 3).reshape(B, L, D)

    def ln(y, g, be):
        u = jnp.mean(y, -1, keepdims=True)
        s = jnp.mean((y - u) ** 2, -1, keepdims=True)
        return g * ((y - u) / jnp.sqrt(s + eps)) + be

    att = ln(lin(ctx, params["wo1"], params["bo1"]) + x, params["g1"], params["be1"])
    inter = lin(att, params["wi"], params["bi"])
    inter = inter * 0.5 * (1.0 + jax.scipy.special.erf(inter * _INV_SQRT2))
    return ln(lin(inter, params["wo2"], params["bo2"]) + att, params["g2"], params["be2"])


if __name__ == "__main__":
    # config: hidden_size=32, num_attention_heads=4, intermediate_size=64,
    #         max_vid_len=3, max_t_len=5 (L=8), layer_norm_eps=1e-12, dropout=identity (eval)
    B, L, D = 2, 8, 32
    num_heads, I = 4, 64
    max_v_len, max_t_len = 3, 5
    eps = 1e-12

    key = jax.random.PRNGKey(0)
    keys = jax.random.split(key, 16)

    def linear_init(kw, kb, out_f, in_f):
        bound = 1.0 / math.sqrt(in_f)
        w = jax.random.uniform(kw, (out_f, in_f), minval=-bound, maxval=bound, dtype=jnp.float32)
        b = jax.random.uniform(kb, (out_f,), minval=-bound, maxval=bound, dtype=jnp.float32)
        return w, b

    wq, bq = linear_init(keys[0], keys[1], D, D)
    wk, bk = linear_init(keys[2], keys[3], D, D)
    wv, bv = linear_init(keys[4], keys[5], D, D)
    wo1, bo1 = linear_init(keys[6], keys[7], D, D)
    wi, bi = linear_init(keys[8], keys[9], I, D)
    wo2, bo2 = linear_init(keys[10], keys[11], D, I)
    params = dict(
        wq=wq, bq=bq, wk=wk, bk=bk, wv=wv, bv=bv,
        wo1=wo1, bo1=bo1,
        g1=1.0 + 0.1 * jax.random.normal(keys[12], (D,), dtype=jnp.float32),
        be1=0.1 * jax.random.normal(keys[13], (D,), dtype=jnp.float32),
        wi=wi, bi=bi, wo2=wo2, bo2=bo2,
        g2=jnp.ones((D,), dtype=jnp.float32),
        be2=jnp.zeros((D,), dtype=jnp.float32),
    )

    hidden_states = jax.random.normal(keys[14], (B, L, D), dtype=jnp.float32)
    attention_mask = jnp.array([[1, 1, 1, 1, 1, 1, 0, 0],
                                [1, 1, 1, 1, 1, 1, 1, 1]], dtype=jnp.float32)

    out = bert_layer_no_memory(hidden_states, attention_mask, params,
                               max_v_len=max_v_len, max_t_len=max_t_len,
                               num_heads=num_heads, eps=eps)
    out = jax.block_until_ready(out)

    ref = _reference_layer(hidden_states, attention_mask, params,
                           max_v_len=max_v_len, max_t_len=max_t_len,
                           num_heads=num_heads, eps=eps)

    assert out.shape == (B, L, D)
    # DEFAULT-precision MXU (bf16 single pass) + approx reciprocal -> small, expected drift
    # vs the plain-JAX reference (also DEFAULT precision); tolerance loosened accordingly.
    assert jnp.allclose(out, ref, atol=2e-2, rtol=2e-2), "mismatch vs reference"
    print("KERNEL_OK")
</pallas_src>

<mosaic_0001>
module attributes {stable_mosaic.version = 11 : i64} {
  func.func @_attention_block_kernel(%arg0: i32, %arg1: memref<1x1x8xf32, #tpu.memory_space<vmem>>, %arg2: memref<1x8x32xf32, #tpu.memory_space<vmem>>, %arg3: memref<96x32xf32, #tpu.memory_space<vmem>>, %arg4: memref<1x96xf32, #tpu.memory_space<vmem>>, %arg5: memref<32x32xf32, #tpu.memory_space<vmem>>, %arg6: memref<1x32xf32, #tpu.memory_space<vmem>>, %arg7: memref<1x32xf32, #tpu.memory_space<vmem>>, %arg8: memref<1x32xf32, #tpu.memory_space<vmem>>, %arg9: memref<1x8x32xf32, #tpu.memory_space<vmem>>, %arg10: memref<8x32xf32, #tpu.memory_space<vmem>>) attributes {dimension_semantics = [#tpu.dimension_semantics<parallel>], iteration_bounds = array<i64: 2>, scalar_prefetch = 0 : i64, scratch_operands = 1 : i64, tpu.core_type = #tpu.core_type<tc>, window_params = [{transform_indices = @transform_0, window_bounds = array<i64: 1, 1, 8>}, {transform_indices = @transform_1, window_bounds = array<i64: 1, 8, 32>}, {pipeline_mode = #tpu.pipeline_mode<synchronous>, transform_indices = @transform_2, window_bounds = array<i64: 96, 32>}, {pipeline_mode = #tpu.pipeline_mode<synchronous>, transform_indices = @transform_3, window_bounds = array<i64: 1, 96>}, {pipeline_mode = #tpu.pipeline_mode<synchronous>, transform_indices = @transform_4, window_bounds = array<i64: 32, 32>}, {pipeline_mode = #tpu.pipeline_mode<synchronous>, transform_indices = @transform_5, window_bounds = array<i64: 1, 32>}, {pipeline_mode = #tpu.pipeline_mode<synchronous>, transform_indices = @transform_6, window_bounds = array<i64: 1, 32>}, {pipeline_mode = #tpu.pipeline_mode<synchronous>, transform_indices = @transform_7, window_bounds = array<i64: 1, 32>}, {transform_indices = @transform_8, window_bounds = array<i64: 1, 8, 32>}]} {
    %c0 = arith.constant 0 : index
    %c0_0 = arith.constant 0 : index
    %c0_1 = arith.constant 0 : index
    %0 = vector.load %arg2[%c0, %c0_0, %c0_1] : memref<1x8x32xf32, #tpu.memory_space<vmem>>, vector<1x8x32xf32>
    %1 = vector.shape_cast %0 : vector<1x8x32xf32> to vector<8x32xf32>
    %c0_2 = arith.constant 0 : index
    %c0_3 = arith.constant 0 : index
    %2 = vector.load %arg3[%c0_2, %c0_3] : memref<96x32xf32, #tpu.memory_space<vmem>>, vector<96x32xf32>
    %cst = arith.constant dense<0.000000e+00> : vector<8x96xf32>
    %3 = tpu.matmul %1, %2, %cst {dimension_numbers = #tpu.dot_dimension_numbers<[1], [1], [0], [0], [0, 0, 1, 0], [], []>} : vector<8x32xf32>, vector<96x32xf32>, vector<8x96xf32> -> vector<8x96xf32>
    %c0_4 = arith.constant 0 : index
    %c0_5 = arith.constant 0 : index
    %4 = vector.load %arg4[%c0_4, %c0_5] : memref<1x96xf32, #tpu.memory_space<vmem>>, vector<1x96xf32>
    %5 = vector.broadcast %4 : vector<1x96xf32> to vector<8x96xf32>
    %6 = arith.addf %3, %5 : vector<8x96xf32>
    %7 = vector.extract_strided_slice %6 {offsets = [0, 0], sizes = [8, 32], strides = [1, 1]} : vector<8x96xf32> to vector<8x32xf32>
    %cst_6 = arith.constant 0.353553385 : f32
    %8 = vector.broadcast %cst_6 : f32 to vector<8x32xf32>
    %9 = arith.mulf %7, %8 : vector<8x32xf32>
    %10 = vector.extract_strided_slice %6 {offsets = [0, 32], sizes = [8, 32], strides = [1, 1]} : vector<8x96xf32> to vector<8x32xf32>
    %11 = vector.extract_strided_slice %6 {offsets = [0, 64], sizes = [8, 32], strides = [1, 1]} : vector<8x96xf32> to vector<8x32xf32>
    %12 = tpu.iota {dimensions = array<i32: 0>} : vector<8x8xi32>
    %13 = tpu.iota {dimensions = array<i32: 1>} : vector<8x8xi32>
    %c3_i32 = arith.constant 3 : i32
    %14 = vector.broadcast %c3_i32 : i32 to vector<8x8xi32>
    %15 = arith.cmpi slt, %13, %14 : vector<8x8xi32>
    %c3_i32_7 = arith.constant 3 : i32
    %16 = vector.broadcast %c3_i32_7 : i32 to vector<8x8xi32>
    %17 = arith.cmpi sge, %12, %16 : vector<8x8xi32>
    %18 = arith.cmpi sle, %13, %12 : vector<8x8xi32>
    %19 = arith.andi %17, %18 : vector<8x8xi1>
    %20 = arith.ori %15, %19 : vector<8x8xi1>
    %cst_8 = arith.constant 1.000000e+00 : f32
    %cst_9 = arith.constant 0.000000e+00 : f32
    %21 = vector.broadcast %cst_8 : f32 to vector<8x8xf32>
    %22 = vector.broadcast %cst_9 : f32 to vector<8x8xf32>
    %23 = arith.select %20, %21, %22 : vector<8x8xi1>, vector<8x8xf32>
    %c0_10 = arith.constant 0 : index
    %c0_11 = arith.constant 0 : index
    %c0_12 = arith.constant 0 : index
    %24 = vector.load %arg1[%c0_10, %c0_11, %c0_12] : memref<1x1x8xf32, #tpu.memory_space<vmem>>, vector<1x1x8xf32>
    %25 = vector.shape_cast %24 : vector<1x1x8xf32> to vector<1x8xf32>
    %26 = vector.broadcast %25 : vector<1x8xf32> to vector<8x8xf32>
    %27 = arith.mulf %23, %26 : vector<8x8xf32>
    %cst_13 = arith.constant 1.000000e+00 : f32
    %28 = vector.broadcast %cst_13 : f32 to vector<8x8xf32>
    %29 = arith.subf %28, %27 : vector<8x8xf32>
    %cst_14 = arith.constant -1.000000e+04 : f32
    %30 = vector.broadcast %cst_14 : f32 to vector<8x8xf32>
    %31 = arith.mulf %29, %30 : vector<8x8xf32>
    %32 = vector.extract_strided_slice %9 {offsets = [0, 0], sizes = [8, 8], strides = [1, 1]} : vector<8x32xf32> to vector<8x8xf32>
    %33 = vector.extract_strided_slice %10 {offsets = [0, 0], sizes = [8, 8], strides = [1, 1]} : vector<8x32xf32> to vector<8x8xf32>
    %cst_15 = arith.constant dense<0.000000e+00> : vector<8x8xf32>
    %34 = tpu.matmul %32, %33, %cst_15 {dimension_numbers = #tpu.dot_dimension_numbers<[1], [1], [0], [0], [0, 0, 1, 0], [], []>} : vector<8x8xf32>, vector<8x8xf32>, vector<8x8xf32> -> vector<8x8xf32>
    %35 = arith.addf %34, %31 : vector<8x8xf32>
    %cst_16 = arith.constant dense<0xFF800000> : vector<8xf32>
    %36 = vector.multi_reduction <maximumf>, %35, %cst_16 [1] : vector<8x8xf32> to vector<8xf32>
    %37 = vector.shape_cast %36 : vector<8xf32> to vector<8x1xf32>
    %38 = vector.broadcast %37 : vector<8x1xf32> to vector<8x8xf32>
    %39 = arith.subf %35, %38 : vector<8x8xf32>
    %40 = math.exp %39 : vector<8x8xf32>
    %cst_17 = arith.constant dense<0.000000e+00> : vector<8xf32>
    %41 = vector.multi_reduction <add>, %40, %cst_17 [1] : vector<8x8xf32> to vector<8xf32>
    %42 = vector.shape_cast %41 : vector<8xf32> to vector<8x1xf32>
    %43 = tpu.reciprocal %42 {approx = true} : vector<8x1xf32> -> vector<8x1xf32>
    %44 = vector.broadcast %43 : vector<8x1xf32> to vector<8x8xf32>
    %45 = arith.mulf %40, %44 : vector<8x8xf32>
    %46 = vector.extract_strided_slice %11 {offsets = [0, 0], sizes = [8, 8], strides = [1, 1]} : vector<8x32xf32> to vector<8x8xf32>
    %cst_18 = arith.constant dense<0.000000e+00> : vector<8x8xf32>
    %47 = tpu.matmul %45, %46, %cst_18 {dimension_numbers = #tpu.dot_dimension_numbers<[1], [0], [0], [1], [0, 0, 1, 1], [], []>} : vector<8x8xf32>, vector<8x8xf32>, vector<8x8xf32> -> vector<8x8xf32>
    %c0_19 = arith.constant 0 : index
    %c0_20 = arith.constant 0 : index
    %48 = vector.load %arg10[%c0_19, %c0_20] : memref<8x32xf32, #tpu.memory_space<vmem>>, vector<8x8xf32>
    tpu.vector_store %arg10[%c0_19, %c0_20], %47 {strides = array<i32>} : memref<8x32xf32, #tpu.memory_space<vmem>>, vector<8x8xf32>,
    %49 = vector.extract_strided_slice %9 {offsets = [0, 8], sizes = [8, 8], strides = [1, 1]} : vector<8x32xf32> to vector<8x8xf32>
    %50 = vector.extract_strided_slice %10 {offsets = [0, 8], sizes = [8, 8], strides = [1, 1]} : vector<8x32xf32> to vector<8x8xf32>
    %cst_21 = arith.constant dense<0.000000e+00> : vector<8x8xf32>
    %51 = tpu.matmul %49, %50, %cst_21 {dimension_numbers = #tpu.dot_dimension_numbers<[1], [1], [0], [0], [0, 0, 1, 0], [], []>} : vector<8x8xf32>, vector<8x8xf32>, vector<8x8xf32> -> vector<8x8xf32>
    %52 = arith.addf %51, %31 : vector<8x8xf32>
    %cst_22 = arith.constant dense<0xFF800000> : vector<8xf32>
    %53 = vector.multi_reduction <maximumf>, %52, %cst_22 [1] : vector<8x8xf32> to vector<8xf32>
    %54 = vector.shape_cast %53 : vector<8xf32> to vector<8x1xf32>
    %55 = vector.broadcast %54 : vector<8x1xf32> to vector<8x8xf32>
    %56 = arith.subf %52, %55 : vector<8x8xf32>
    %57 = math.exp %56 : vector<8x8xf32>
    %cst_23 = arith.constant dense<0.000000e+00> : vector<8xf32>
    %58 = vector.multi_reduction <add>, %57, %cst_23 [1] : vector<8x8xf32> to vector<8xf32>
    %59 = vector.shape_cast %58 : vector<8xf32> to vector<8x1xf32>
    %60 = tpu.reciprocal %59 {approx = true} : vector<8x1xf32> -> vector<8x1xf32>
    %61 = vector.broadcast %60 : vector<8x1xf32> to vector<8x8xf32>
    %62 = arith.mulf %57, %61 : vector<8x8xf32>
    %63 = vector.extract_strided_slice %11 {offsets = [0, 8], sizes = [8, 8], strides = [1, 1]} : vector<8x32xf32> to vector<8x8xf32>
    %cst_24 = arith.constant dense<0.000000e+00> : vector<8x8xf32>
    %64 = tpu.matmul %62, %63, %cst_24 {dimension_numbers = #tpu.dot_dimension_numbers<[1], [0], [0], [1], [0, 0, 1, 1], [], []>} : vector<8x8xf32>, vector<8x8xf32>, vector<8x8xf32> -> vector<8x8xf32>
    %c0_25 = arith.constant 0 : index
    %c8 = arith.constant 8 : index
    %65 = vector.load %arg10[%c0_25, %c8] : memref<8x32xf32, #tpu.memory_space<vmem>>, vector<8x8xf32>
    tpu.vector_store %arg10[%c0_25, %c8], %64 {strides = array<i32>} : memref<8x32xf32, #tpu.memory_space<vmem>>, vector<8x8xf32>,
    %66 = vector.extract_strided_slice %9 {offsets = [0, 16], sizes = [8, 8], strides = [1, 1]} : vector<8x32xf32> to vector<8x8xf32>
    %67 = vector.extract_strided_slice %10 {offsets = [0, 16], sizes = [8, 8], strides = [1, 1]} : vector<8x32xf32> to vector<8x8xf32>
    %cst_26 = arith.constant dense<0.000000e+00> : vector<8x8xf32>
    %68 = tpu.matmul %66, %67, %cst_26 {dimension_numbers = #tpu.dot_dimension_numbers<[1], [1], [0], [0], [0, 0, 1, 0], [], []>} : vector<8x8xf32>, vector<8x8xf32>, vector<8x8xf32> -> vector<8x8xf32>
    %69 = arith.addf %68, %31 : vector<8x8xf32>
    %cst_27 = arith.constant dense<0xFF800000> : vector<8xf32>
    %70 = vector.multi_reduction <maximumf>, %69, %cst_27 [1] : vector<8x8xf32> to vector<8xf32>
    %71 = vector.shape_cast %70 : vector<8xf32> to vector<8x1xf32>
    %72 = vector.broadcast %71 : vector<8x1xf32> to vector<8x8xf32>
    %73 = arith.subf %69, %72 : vector<8x8xf32>
    %74 = math.exp %73 : vector<8x8xf32>
    %cst_28 = arith.constant dense<0.000000e+00> : vector<8xf32>
    %75 = vector.multi_reduction <add>, %74, %cst_28 [1] : vector<8x8xf32> to vector<8xf32>
    %76 = vector.shape_cast %75 : vector<8xf32> to vector<8x1xf32>
    %77 = tpu.reciprocal %76 {approx = true} : vector<8x1xf32> -> vector<8x1xf32>
    %78 = vector.broadcast %77 : vector<8x1xf32> to vector<8x8xf32>
    %79 = arith.mulf %74, %78 : vector<8x8xf32>
    %80 = vector.extract_strided_slice %11 {offsets = [0, 16], sizes = [8, 8], strides = [1, 1]} : vector<8x32xf32> to vector<8x8xf32>
    %cst_29 = arith.constant dense<0.000000e+00> : vector<8x8xf32>
    %81 = tpu.matmul %79, %80, %cst_29 {dimension_numbers = #tpu.dot_dimension_numbers<[1], [0], [0], [1], [0, 0, 1, 1], [], []>} : vector<8x8xf32>, vector<8x8xf32>, vector<8x8xf32> -> vector<8x8xf32>
    %c0_30 = arith.constant 0 : index
    %c16 = arith.constant 16 : index
    %82 = vector.load %arg10[%c0_30, %c16] : memref<8x32xf32, #tpu.memory_space<vmem>>, vector<8x8xf32>
    tpu.vector_store %arg10[%c0_30, %c16], %81 {strides = array<i32>} : memref<8x32xf32, #tpu.memory_space<vmem>>, vector<8x8xf32>,
    %83 = vector.extract_strided_slice %9 {offsets = [0, 24], sizes = [8, 8], strides = [1, 1]} : vector<8x32xf32> to vector<8x8xf32>
    %84 = vector.extract_strided_slice %10 {offsets = [0, 24], sizes = [8, 8], strides = [1, 1]} : vector<8x32xf32> to vector<8x8xf32>
    %cst_31 = arith.constant dense<0.000000e+00> : vector<8x8xf32>
    %85 = tpu.matmul %83, %84, %cst_31 {dimension_numbers = #tpu.dot_dimension_numbers<[1], [1], [0], [0], [0, 0, 1, 0], [], []>} : vector<8x8xf32>, vector<8x8xf32>, vector<8x8xf32> -> vector<8x8xf32>
    %86 = arith.addf %85, %31 : vector<8x8xf32>
    %cst_32 = arith.constant dense<0xFF800000> : vector<8xf32>
    %87 = vector.multi_reduction <maximumf>, %86, %cst_32 [1] : vector<8x8xf32> to vector<8xf32>
    %88 = vector.shape_cast %87 : vector<8xf32> to vector<8x1xf32>
    %89 = vector.broadcast %88 : vector<8x1xf32> to vector<8x8xf32>
    %90 = arith.subf %86, %89 : vector<8x8xf32>
    %91 = math.exp %90 : vector<8x8xf32>
    %cst_33 = arith.constant dense<0.000000e+00> : vector<8xf32>
    %92 = vector.multi_reduction <add>, %91, %cst_33 [1] : vector<8x8xf32> to vector<8xf32>
    %93 = vector.shape_cast %92 : vector<8xf32> to vector<8x1xf32>
    %94 = tpu.reciprocal %93 {approx = true} : vector<8x1xf32> -> vector<8x1xf32>
    %95 = vector.broadcast %94 : vector<8x1xf32> to vector<8x8xf32>
    %96 = arith.mulf %91, %95 : vector<8x8xf32>
    %97 = vector.extract_strided_slice %11 {offsets = [0, 24], sizes = [8, 8], strides = [1, 1]} : vector<8x32xf32> to vector<8x8xf32>
    %cst_34 = arith.constant dense<0.000000e+00> : vector<8x8xf32>
    %98 = tpu.matmul %96, %97, %cst_34 {dimension_numbers = #tpu.dot_dimension_numbers<[1], [0], [0], [1], [0, 0, 1, 1], [], []>} : vector<8x8xf32>, vector<8x8xf32>, vector<8x8xf32> -> vector<8x8xf32>
    %c0_35 = arith.constant 0 : index
    %c24 = arith.constant 24 : index
    %99 = vector.load %arg10[%c0_35, %c24] : memref<8x32xf32, #tpu.memory_space<vmem>>, vector<8x8xf32>
    tpu.vector_store %arg10[%c0_35, %c24], %98 {strides = array<i32>} : memref<8x32xf32, #tpu.memory_space<vmem>>, vector<8x8xf32>,
    %c0_36 = arith.constant 0 : index
    %c0_37 = arith.constant 0 : index
    %100 = vector.load %arg10[%c0_36, %c0_37] : memref<8x32xf32, #tpu.memory_space<vmem>>, vector<8x32xf32>
    %c0_38 = arith.constant 0 : index
    %c0_39 = arith.constant 0 : index
    %101 = vector.load %arg5[%c0_38, %c0_39] : memref<32x32xf32, #tpu.memory_space<vmem>>, vector<32x32xf32>
    %cst_40 = arith.constant dense<0.000000e+00> : vector<8x32xf32>
    %102 = tpu.matmul %100, %101, %cst_40 {dimension_numbers = #tpu.dot_dimension_numbers<[1], [1], [0], [0], [0, 0, 1, 0], [], []>} : vector<8x32xf32>, vector<32x32xf32>, vector<8x32xf32> -> vector<8x32xf32>
    %c0_41 = arith.constant 0 : index
    %c0_42 = arith.constant 0 : index
    %103 = vector.load %arg6[%c0_41, %c0_42] : memref<1x32xf32, #tpu.memory_space<vmem>>, vector<1x32xf32>
    %104 = vector.broadcast %103 : vector<1x32xf32> to vector<8x32xf32>
    %105 = arith.addf %102, %104 : vector<8x32xf32>
    %106 = arith.addf %105, %1 : vector<8x32xf32>
    %cst_43 = arith.constant dense<0.000000e+00> : vector<8xf32>
    %107 = vector.multi_reduction <add>, %106, %cst_43 [1] : vector<8x32xf32> to vector<8xf32>
    %108 = vector.shape_cast %107 : vector<8xf32> to vector<8x1xf32>
    %cst_44 = arith.constant 3.200000e+01 : f32
    %109 = vector.broadcast %cst_44 : f32 to vector<8x1xf32>
    %110 = arith.divf %108, %109 : vector<8x1xf32>
    %111 = vector.broadcast %110 : vector<8x1xf32> to vector<8x32xf32>
    %112 = arith.subf %106, %111 : vector<8x32xf32>
    %113 = arith.mulf %112, %112 : vector<8x32xf32>
    %cst_45 = arith.constant dense<0.000000e+00> : vector<8xf32>
    %114 = vector.multi_reduction <add>, %113, %cst_45 [1] : vector<8x32xf32> to vector<8xf32>
    %115 = vector.shape_cast %114 : vector<8xf32> to vector<8x1xf32>
    %cst_46 = arith.constant 3.200000e+01 : f32
    %116 = vector.broadcast %cst_46 : f32 to vector<8x1xf32>
    %117 = arith.divf %115, %116 : vector<8x1xf32>
    %cst_47 = arith.constant 9.99999996E-13 : f32
    %118 = vector.broadcast %cst_47 : f32 to vector<8x1xf32>
    %119 = arith.addf %117, %118 : vector<8x1xf32>
    %120 = math.rsqrt %119 : vector<8x1xf32>
    %121 = vector.broadcast %120 : vector<8x1xf32> to vector<8x32xf32>
    %122 = arith.mulf %112, %121 : vector<8x32xf32>
    %c0_48 = arith.constant 0 : index
    %c0_49 = arith.constant 0 : index
    %123 = vector.load %arg7[%c0_48, %c0_49] : memref<1x32xf32, #tpu.memory_space<vmem>>, vector<1x32xf32>
    %124 = vector.broadcast %123 : vector<1x32xf32> to vector<8x32xf32>
    %125 = arith.mulf %124, %122 : vector<8x32xf32>
    %c0_50 = arith.constant 0 : index
    %c0_51 = arith.constant 0 : index
    %126 = vector.load %arg8[%c0_50, %c0_51] : memref<1x32xf32, #tpu.memory_space<vmem>>, vector<1x32xf32>
    %127 = vector.broadcast %126 : vector<1x32xf32> to vector<8x32xf32>
    %128 = arith.addf %125, %127 : vector<8x32xf32>
    %c0_52 = arith.constant 0 : index
    %c0_53 = arith.constant 0 : index
    %c0_54 = arith.constant 0 : index
    %129 = vector.load %arg9[%c0_52, %c0_53, %c0_54] : memref<1x8x32xf32, #tpu.memory_space<vmem>>, vector<1x8x32xf32>
    %130 = vector.shape_cast %129 : vector<1x8x32xf32> to vector<8x32xf32>
    %131 = vector.shape_cast %128 : vector<8x32xf32> to vector<1x8x32xf32>
    tpu.vector_store %arg9[%c0_52, %c0_53, %c0_54], %131 {strides = array<i32>} : memref<1x8x32xf32, #tpu.memory_space<vmem>>, vector<1x8x32xf32>,
    return
  }
  func.func @transform_0(%arg0: i32) -> (i32, i32, i32) {
    %c0_i32 = arith.constant 0 : i32
    %c0_i32_0 = arith.constant 0 : i32
    %c0_i32_1 = arith.constant 0 : i32
    return %arg0, %c0_i32, %c0_i32_0 : i32, i32, i32
  }
  func.func @transform_1(%arg0: i32) -> (i32, i32, i32) {
    %c0_i32 = arith.constant 0 : i32
    %c0_i32_0 = arith.constant 0 : i32
    %c0_i32_1 = arith.constant 0 : i32
    return %arg0, %c0_i32, %c0_i32_0 : i32, i32, i32
  }
  func.func @transform_2(%arg0: i32) -> (i32, i32) {
    %c0_i32 = arith.constant 0 : i32
    %c0_i32_0 = arith.constant 0 : i32
    %c0_i32_1 = arith.constant 0 : i32
    return %c0_i32, %c0_i32_0 : i32, i32
  }
  func.func @transform_3(%arg0: i32) -> (i32, i32) {
    %c0_i32 = arith.constant 0 : i32
    %c0_i32_0 = arith.constant 0 : i32
    %c0_i32_1 = arith.constant 0 : i32
    return %c0_i32, %c0_i32_0 : i32, i32
  }
  func.func @transform_4(%arg0: i32) -> (i32, i32) {
    %c0_i32 = arith.constant 0 : i32
    %c0_i32_0 = arith.constant 0 : i32
    %c0_i32_1 = arith.constant 0 : i32
    return %c0_i32, %c0_i32_0 : i32, i32
  }
  func.func @transform_5(%arg0: i32) -> (i32, i32) {
    %c0_i32 = arith.constant 0 : i32
    %c0_i32_0 = arith.constant 0 : i32
    %c0_i32_1 = arith.constant 0 : i32
    return %c0_i32, %c0_i32_0 : i32, i32
  }
  func.func @transform_6(%arg0: i32) -> (i32, i32) {
    %c0_i32 = arith.constant 0 : i32
    %c0_i32_0 = arith.constant 0 : i32
    %c0_i32_1 = arith.constant 0 : i32
    return %c0_i32, %c0_i32_0 : i32, i32
  }
  func.func @transform_7(%arg0: i32) -> (i32, i32) {
    %c0_i32 = arith.constant 0 : i32
    %c0_i32_0 = arith.constant 0 : i32
    %c0_i32_1 = arith.constant 0 : i32
    return %c0_i32, %c0_i32_0 : i32, i32
  }
  func.func @transform_8(%arg0: i32) -> (i32, i32, i32) {
    %c0_i32 = arith.constant 0 : i32
    %c0_i32_0 = arith.constant 0 : i32
    %c0_i32_1 = arith.constant 0 : i32
    return %arg0, %c0_i32, %c0_i32_0 : i32, i32, i32
  }
}

</mosaic_0001>

<llo_original>
// kernel: tpu_custom_call.1
$region0: #{tpu_custom_call.1}
  #allocation0 [shape = 'u32[]', space=smem, size = 0x4, offset = 0x4, fixed_abs, tag = 'smem constant byte address 0x4 - core index']
  #allocation1 [shape = 'u32[144,128]{1,0:T(1,128)}', space=vmem, size = 0x12000, scoped, tag = 'internal scratch']
  #allocation2 [shape = 'f32[8,32]{1,0:T(8,128)}', space=vmem, size = 0x1000, scoped, tag = 'scratch operand']
  %s0 = inlined_call_operand.vmem [shape: f32[2,1,8], index: 0, kind: input, shape index: {}]
  %s1 = inlined_call_operand.vmem [shape: f32[2,8,32], index: 1, kind: input, shape index: {}]
  %s2 = inlined_call_operand.vmem [shape: f32[96,32], index: 2, kind: input, shape index: {}]
  %s3 = inlined_call_operand.vmem [shape: f32[1,96], index: 3, kind: input, shape index: {}]
  %s4 = inlined_call_operand.vmem [shape: f32[32,32], index: 4, kind: input, shape index: {}]
  %s5 = inlined_call_operand.vmem [shape: f32[1,32], index: 5, kind: input, shape index: {}]
  %s6 = inlined_call_operand.vmem [shape: f32[1,32], index: 6, kind: input, shape index: {}]
  %s7 = inlined_call_operand.vmem [shape: f32[1,32], index: 7, kind: input, shape index: {}]
  %s8 = inlined_call_operand.hbm [shape: f32[2,8,32], index: 8, kind: output, shape index: {}]
  %s9 = sld [smem:[#allocation0]]
  $region65: #{tpu_custom_call.1} parent=0
    _
  %s11 = ssub.s32 1, %s9
  %s12 = scalar_select 0, %s11, %s9
  $region1: #{tpu_custom_call.1} parent=0
    #allocation3 [shape = 'u8[8192]{0}', space=vmem, size = 0x2000, scoped, tag = 'output window, operand 0']
    #allocation4 [shape = 's32[2]{0}', space=sflag, size = 0x8, scoped, tag = 'scoped memory for tpu_custom_call.1']
    %13 = vsyncpa [#allocation4], 0
    %s14 = scalar_lea.sflag [#allocation4], 1
    %15 = vsyncpa %s14, 0
    loop: start=0, step=1, limit=4
    $region2: #{tpu_custom_call.1} parent=1 // loop_pre_header
      _
    $region3: #{tpu_custom_call.1} parent=1 // loop_header
      %s17 = sphi 0, %s21
      %p18 = scmp.ge.s32.totalorder %s17, 4
      %s27 = sphi 0, %s29
      %s30 = sphi 0, %s27
      %s31 = sphi 0, %s30
      %s47 = sphi 0, %s31
      %s53 = sphi 0, %s55
      %s56 = sphi 0, %s53
      %s57 = sphi 0, %s56
      %s73 = sphi 0, %s57
      %s77 = sphi 0, %s77
      %s79 = sphi 0, %s77
      %s80 = sphi 0, %s79
      %s94 = sphi 0, %s80
      %s98 = sphi 0, %s98
      %s100 = sphi 0, %s98
      %s101 = sphi 0, %s100
      %s115 = sphi 0, %s101
      %s119 = sphi 0, %s119
      %s121 = sphi 0, %s119
      %s122 = sphi 0, %s121
      %s136 = sphi 0, %s122
      %s140 = sphi 0, %s140
      %s142 = sphi 0, %s140
      %s143 = sphi 0, %s142
      %s157 = sphi 0, %s143
      %s161 = sphi 0, %s161
      %s163 = sphi 0, %s161
      %s164 = sphi 0, %s163
      %s178 = sphi 0, %s164
      %s182 = sphi 0, %s182
      %s184 = sphi 0, %s182
      %s185 = sphi 0, %s184
      %s199 = sphi 0, %s185
      %s205 = sphi 0, %s207
      %s208 = sphi 0, %s205
      %s209 = sphi 0, %s208
      %s225 = sphi 0, %s209
    $region4: #{tpu_custom_call.1} parent=1 // loop_header_branch
      %20 = sbr.rel (%p18) target = $region8
    $region5: #{tpu_custom_call.1} parent=1 // loop_body
      %s22 = ssub.s32 %s17, 1
      %s23 = ssub.s32 %s17, 2
      %s24 = sadd.s32 %s17, 1
      %s25 = ssub.s32 %s17, %s24
      %p26 = scmp.eq.s32.totalorder %s25, 0
      %s28 = sadd.s32 %s27, 1
      %s29 = scalar_select %p26, %s27, %s28
      %p32 = pneg %p26
      %p33 = scmp.eq.s32.totalorder %s17, 1
      %p34 = por %p32, %p33
      %p35 = scmp.ne.s32.totalorder %s27, %s30
      %p36 = scmp.eq.s32.totalorder %s17, 0
      %p37 = por %p35, %p36
      %p38 = scmp.ne.s32.totalorder %s27, %s30
      %p39 = scmp.eq.s32.totalorder %s22, 1
      %p40 = por %p38, %p39
      %p41 = scmp.ne.s32.totalorder %s30, %s31
      %p42 = scmp.eq.s32.totalorder %s22, 0
      %p43 = por %p41, %p42
      %p44 = scmp.ne.s32.totalorder %s30, %s31
      %p45 = scmp.eq.s32.totalorder %s23, 1
      %p46 = por %p44, %p45
      %p48 = scmp.ne.s32.totalorder %s31, %s47
      %p49 = scmp.eq.s32.totalorder %s23, 0
      %p50 = por %p48, %p49
      %s51 = ssub.s32 %s17, %s24
      %p52 = scmp.eq.s32.totalorder %s51, 0
      %s54 = sadd.s32 %s53, 1
      %s55 = scalar_select %p52, %s53, %s54
      %p58 = pneg %p52
      %p59 = scmp.eq.s32.totalorder %s17, 1
      %p60 = por %p58, %p59
      %p61 = scmp.ne.s32.totalorder %s53, %s56
      %p62 = scmp.eq.s32.totalorder %s17, 0
      %p63 = por %p61, %p62
      %p64 = scmp.ne.s32.totalorder %s53, %s56
      %p65 = scmp.eq.s32.totalorder %s22, 1
      %p66 = por %p64, %p65
      %p67 = scmp.ne.s32.totalorder %s56, %s57
      %p68 = scmp.eq.s32.totalorder %s22, 0
      %p69 = por %p67, %p68
      %p70 = scmp.ne.s32.totalorder %s56, %s57
      %p71 = scmp.eq.s32.totalorder %s23, 1
      %p72 = por %p70, %p71
      %p74 = scmp.ne.s32.totalorder %s57, %s73
      %p75 = scmp.eq.s32.totalorder %s23, 0
      %p76 = por %p74, %p75
      %s78 = sadd.s32 %s77, 1
      %p81 = scmp.eq.s32.totalorder %s17, 1
      %p82 = scmp.ne.s32.totalorder %s77, %s79
      %p83 = scmp.eq.s32.totalorder %s17, 0
      %p84 = por %p82, %p83
      %p85 = scmp.ne.s32.totalorder %s77, %s79
      %p86 = scmp.eq.s32.totalorder %s22, 1
      %p87 = por %p85, %p86
      %p88 = scmp.ne.s32.totalorder %s79, %s80
      %p89 = scmp.eq.s32.totalorder %s22, 0
      %p90 = por %p88, %p89
      %p91 = scmp.ne.s32.totalorder %s79, %s80
      %p92 = scmp.eq.s32.totalorder %s23, 1
      %p93 = por %p91, %p92
      %p95 = scmp.ne.s32.totalorder %s80, %s94
      %p96 = scmp.eq.s32.totalorder %s23, 0
      %p97 = por %p95, %p96
      %s99 = sadd.s32 %s98, 1
      %p102 = scmp.eq.s32.totalorder %s17, 1
      %p103 = scmp.ne.s32.totalorder %s98, %s100
      %p104 = scmp.eq.s32.totalorder %s17, 0
      %p105 = por %p103, %p104
      %p106 = scmp.ne.s32.totalorder %s98, %s100
      %p107 = scmp.eq.s32.totalorder %s22, 1
      %p108 = por %p106, %p107
      %p109 = scmp.ne.s32.totalorder %s100, %s101
      %p110 = scmp.eq.s32.totalorder %s22, 0
      %p111 = por %p109, %p110
      %p112 = scmp.ne.s32.totalorder %s100, %s101
      %p113 = scmp.eq.s32.totalorder %s23, 1
      %p114 = por %p112, %p113
      %p116 = scmp.ne.s32.totalorder %s101, %s115
      %p117 = scmp.eq.s32.totalorder %s23, 0
      %p118 = por %p116, %p117
      %s120 = sadd.s32 %s119, 1
      %p123 = scmp.eq.s32.totalorder %s17, 1
      %p124 = scmp.ne.s32.totalorder %s119, %s121
      %p125 = scmp.eq.s32.totalorder %s17, 0
      %p126 = por %p124, %p125
      %p127 = scmp.ne.s32.totalorder %s119, %s121
      %p128 = scmp.eq.s32.totalorder %s22, 1
      %p129 = por %p127, %p128
      %p130 = scmp.ne.s32.totalorder %s121, %s122
      %p131 = scmp.eq.s32.totalorder %s22, 0
      %p132 = por %p130, %p131
      %p133 = scmp.ne.s32.totalorder %s121, %s122
      %p134 = scmp.eq.s32.totalorder %s23, 1
      %p135 = por %p133, %p134
      %p137 = scmp.ne.s32.totalorder %s122, %s136
      %p138 = scmp.eq.s32.totalorder %s23, 0
      %p139 = por %p137, %p138
      %s141 = sadd.s32 %s140, 1
      %p144 = scmp.eq.s32.totalorder %s17, 1
      %p145 = scmp.ne.s32.totalorder %s140, %s142
      %p146 = scmp.eq.s32.totalorder %s17, 0
      %p147 = por %p145, %p146
      %p148 = scmp.ne.s32.totalorder %s140, %s142
      %p149 = scmp.eq.s32.totalorder %s22, 1
      %p150 = por %p148, %p149
      %p151 = scmp.ne.s32.totalorder %s142, %s143
      %p152 = scmp.eq.s32.totalorder %s22, 0
      %p153 = por %p151, %p152
      %p154 = scmp.ne.s32.totalorder %s142, %s143
      %p155 = scmp.eq.s32.totalorder %s23, 1
      %p156 = por %p154, %p155
      %p158 = scmp.ne.s32.totalorder %s143, %s157
      %p159 = scmp.eq.s32.totalorder %s23, 0
      %p160 = por %p158, %p159
      %s162 = sadd.s32 %s161, 1
      %p165 = scmp.eq.s32.totalorder %s17, 1
      %p166 = scmp.ne.s32.totalorder %s161, %s163
      %p167 = scmp.eq.s32.totalorder %s17, 0
      %p168 = por %p166, %p167
      %p169 = scmp.ne.s32.totalorder %s161, %s163
      %p170 = scmp.eq.s32.totalorder %s22, 1
      %p171 = por %p169, %p170
      %p172 = scmp.ne.s32.totalorder %s163, %s164
      %p173 = scmp.eq.s32.totalorder %s22, 0
      %p174 = por %p172, %p173
      %p175 = scmp.ne.s32.totalorder %s163, %s164
      %p176 = scmp.eq.s32.totalorder %s23, 1
      %p177 = por %p175, %p176
      %p179 = scmp.ne.s32.totalorder %s164, %s178
      %p180 = scmp.eq.s32.totalorder %s23, 0
      %p181 = por %p179, %p180
      %s183 = sadd.s32 %s182, 1
      %p186 = scmp.eq.s32.totalorder %s17, 1
      %p187 = scmp.ne.s32.totalorder %s182, %s184
      %p188 = scmp.eq.s32.totalorder %s17, 0
      %p189 = por %p187, %p188
      %p190 = scmp.ne.s32.totalorder %s182, %s184
      %p191 = scmp.eq.s32.totalorder %s22, 1
      %p192 = por %p190, %p191
      %p193 = scmp.ne.s32.totalorder %s184, %s185
      %p194 = scmp.eq.s32.totalorder %s22, 0
      %p195 = por %p193, %p194
      %p196 = scmp.ne.s32.totalorder %s184, %s185
      %p197 = scmp.eq.s32.totalorder %s23, 1
      %p198 = por %p196, %p197
      %p200 = scmp.ne.s32.totalorder %s185, %s199
      %p201 = scmp.eq.s32.totalorder %s23, 0
      %p202 = por %p200, %p201
      %s203 = ssub.s32 %s17, %s24
      %p204 = scmp.eq.s32.totalorder %s203, 0
      %s206 = sadd.s32 %s205, 1
      %s207 = scalar_select %p204, %s205, %s206
      %p210 = pneg %p204
      %p211 = scmp.eq.s32.totalorder %s17, 1
      %p212 = por %p210, %p211
      %p213 = scmp.ne.s32.totalorder %s205, %s208
      %p214 = scmp.eq.s32.totalorder %s17, 0
      %p215 = por %p213, %p214
      %p216 = scmp.ne.s32.totalorder %s205, %s208
      %p217 = scmp.eq.s32.totalorder %s22, 1
      %p218 = por %p216, %p217
      %p219 = scmp.ne.s32.totalorder %s208, %s209
      %p220 = scmp.eq.s32.totalorder %s22, 0
      %p221 = por %p219, %p220
      %p222 = scmp.ne.s32.totalorder %s208, %s209
      %p223 = scmp.eq.s32.totalorder %s23, 1
      %p224 = por %p222, %p223
      %p226 = scmp.ne.s32.totalorder %s209, %s225
      %p227 = scmp.eq.s32.totalorder %s23, 0
      %p228 = por %p226, %p227
      %p229 = scmp.le.s32.totalorder 1, %s17
      %p230 = scmp.lt.s32.totalorder %s17, 3
      %p231 = pnand %p229, %p230
      %p232 = pneg %p231
      // Predicated region
      $region9: #{tpu_custom_call.1} parent=5 // pred_check
        _
      $region10: #{tpu_custom_call.1} parent=5 // pred_check_branch
        %234 = sbr.rel (%p231) target = $region12
      $region11: #{tpu_custom_call.1} parent=5 // pred_region
        %s235 = ssub.s32 %s17, 1
        // Predicated region
        $region13: #{tpu_custom_call.1} parent=11 // pred_check
          %p236 = pneg %p90
        $region14: #{tpu_custom_call.1} parent=11 // pred_check_branch
          %238 = sbr.rel (%p236) target = $region16
        $region15: #{tpu_custom_call.1} parent=11 // pred_region
          _
        $region16: #{tpu_custom_call.1} parent=11 // pred_fallthru
          _
        // Predicated region
        $region17: #{tpu_custom_call.1} parent=11 // pred_check
          %p239 = pneg %p111
        $region18: #{tpu_custom_call.1} parent=11 // pred_check_branch
          %241 = sbr.rel (%p239) target = $region20
        $region19: #{tpu_custom_call.1} parent=11 // pred_region
          _
        $region20: #{tpu_custom_call.1} parent=11 // pred_fallthru
          _
        // Predicated region
        $region21: #{tpu_custom_call.1} parent=11 // pred_check
          %p242 = pneg %p132
        $region22: #{tpu_custom_call.1} parent=11 // pred_check_branch
          %244 = sbr.rel (%p242) target = $region24
        $region23: #{tpu_custom_call.1} parent=11 // pred_region
          _
        $region24: #{tpu_custom_call.1} parent=11 // pred_fallthru
          _
        // Predicated region
        $region25: #{tpu_custom_call.1} parent=11 // pred_check
          %p245 = pneg %p153
        $region26: #{tpu_custom_call.1} parent=11 // pred_check_branch
          %247 = sbr.rel (%p245) target = $region28
        $region27: #{tpu_custom_call.1} parent=11 // pred_region
          _
        $region28: #{tpu_custom_call.1} parent=11 // pred_fallthru
          _
        // Predicated region
        $region29: #{tpu_custom_call.1} parent=11 // pred_check
          %p248 = pneg %p174
        $region30: #{tpu_custom_call.1} parent=11 // pred_check_branch
          %250 = sbr.rel (%p248) target = $region32
        $region31: #{tpu_custom_call.1} parent=11 // pred_region
          _
        $region32: #{tpu_custom_call.1} parent=11 // pred_fallthru
          _
        // Predicated region
        $region33: #{tpu_custom_call.1} parent=11 // pred_check
          %p251 = pneg %p195
        $region34: #{tpu_custom_call.1} parent=11 // pred_check_branch
          %253 = sbr.rel (%p251) target = $region36
        $region35: #{tpu_custom_call.1} parent=11 // pred_region
          _
        $region36: #{tpu_custom_call.1} parent=11 // pred_fallthru
          _
      $region12: #{tpu_custom_call.1} parent=5 // pred_fallthru
        _
      %p254 = scmp.lt.s32.totalorder %s17, 2
      // Predicated region
      $region37: #{tpu_custom_call.1} parent=5 // pred_check
        %p255 = pneg %p254
      $region38: #{tpu_custom_call.1} parent=5 // pred_check_branch
        %257 = sbr.rel (%p255) target = $region40
      $region39: #{tpu_custom_call.1} parent=5 // pred_region
        // Predicated region
        $region41: #{tpu_custom_call.1} parent=39 // pred_check
          %p258 = pneg %p37
        $region42: #{tpu_custom_call.1} parent=39 // pred_check_branch
          %260 = sbr.rel (%p258) target = $region44
        $region43: #{tpu_custom_call.1} parent=39 // pred_region
          %p261 = scmp.lt.s32.totalorder %s17, 1
          %s262 = scalar_select %p261, %s17, 1
          %s263 = scalar_lea.vmem %s0, %s262
        $region44: #{tpu_custom_call.1} parent=39 // pred_fallthru
          _
        // Predicated region
        $region45: #{tpu_custom_call.1} parent=39 // pred_check
          %p264 = pneg %p63
        $region46: #{tpu_custom_call.1} parent=39 // pred_check_branch
          %266 = sbr.rel (%p264) target = $region48
        $region47: #{tpu_custom_call.1} parent=39 // pred_region
          %p267 = scmp.lt.s32.totalorder %s17, 1
          %s268 = scalar_select %p267, %s17, 1
          %s269 = smul.addr %s268, 8
          %s270 = scalar_lea.vmem %s1, %s269
        $region48: #{tpu_custom_call.1} parent=39 // pred_fallthru
          _
      $region40: #{tpu_custom_call.1} parent=5 // pred_fallthru
        _
      %p271 = scmp.le.s32.totalorder 1, %s17
      %p272 = scmp.lt.s32.totalorder %s17, 3
      %p273 = pnand %p271, %p272
      %p274 = pneg %p273
      // Predicated region
      $region49: #{tpu_custom_call.1} parent=5 // pred_check
        _
      $region50: #{tpu_custom_call.1} parent=5 // pred_check_branch
        %276 = sbr.rel (%p273) target = $region52
      $region51: #{tpu_custom_call.1} parent=5 // pred_region
        %s277 = ssub.s32 %s17, 1
        %p278 = scmp.lt.s32.totalorder %s22, 1
        %s279 = scalar_select %p278, %s22, 1
        %s280 = scalar_lea.vmem %s0, %s279
        %p281 = pneg %p43
        %p282 = pneg %p40
        %p283 = scmp.lt.s32.totalorder %s22, 1
        %s284 = scalar_select %p283, %s22, 1
        %s285 = smul.addr %s284, 8
        %s286 = scalar_lea.vmem %s1, %s285
        %p287 = pneg %p69
        %p288 = pneg %p66
        %p289 = pneg %p90
        %p290 = pneg %p87
        %p291 = pneg %p111
        %p292 = pneg %p108
        %p293 = pneg %p132
        %p294 = pneg %p129
        %p295 = pneg %p153
        %p296 = pneg %p150
        %p297 = pneg %p174
        %p298 = pneg %p171
        %p299 = pneg %p195
        %p300 = pneg %p192
        %p301 = pneg %p221
        %p302 = pneg %p218
        %s303 = sand.u32 %s208, 1
        %s304 = scalar_lea.sflag [#allocation4], %s303
        %s305 = sand.u32 %s208, 1
        %s306 = smul.addr %s305, 8
        %s307 = scalar_lea.vmem [#allocation3], %s306
        %p308 = scmp.lt.s32.totalorder %s22, 1
        %s309 = scalar_select %p308, %s22, 1
        %s310 = scalar_lea.vmem %s0, %s309
        %p311 = scmp.lt.s32.totalorder %s22, 1
        %s312 = scalar_select %p311, %s22, 1
        %s313 = smul.addr %s312, 8
        %s314 = scalar_lea.vmem %s1, %s313
        %v315 = vld [vmem:[%s314] sm:$0xff]
        %v316 = vld [vmem:[%s2] sm:$0xff]
        %v317 = vld [vmem:[%s2 + $0x8] sm:$0xff]
        %v318 = vld [vmem:[%s2 + $0x10] sm:$0xff]
        %v319 = vld [vmem:[%s2 + $0x18] sm:$0xff]
        %v320 = vld [vmem:[%s2 + $0x20] sm:$0xff]
        %v321 = vld [vmem:[%s2 + $0x28] sm:$0xff]
        %v322 = vld [vmem:[%s2 + $0x30] sm:$0xff]
        %v323 = vld [vmem:[%s2 + $0x38] sm:$0xff]
        %v324 = vld [vmem:[%s2 + $0x40] sm:$0xff]
        %v325 = vld [vmem:[%s2 + $0x48] sm:$0xff]
        %v326 = vld [vmem:[%s2 + $0x50] sm:$0xff]
        %v327 = vld [vmem:[%s2 + $0x58] sm:$0xff]
        %v328 = vld [vmem:[%s3] sm:$0x1]
        %v330 = vlaneseq
        %v331 = vshrl.u32 %v330, 7
        %v332 = vsub.s32 0, %v331
        %v333 = vrot.slane %v328, %v332
        %vm335 = vcmask 261120
        %v337 = vsel %vm335, %v315, 0
        %v340 = vsel %vm335, %v316, 0
        %v343 = vsel %vm335, %v317, 0
        %v346 = vsel %vm335, %v318, 0
        %v349 = vsel %vm335, %v319, 0
        %v352 = vsel %vm335, %v320, 0
        %v355 = vsel %vm335, %v321, 0
        %v358 = vsel %vm335, %v322, 0
        %v361 = vsel %vm335, %v323, 0
        %v364 = vsel %vm335, %v324, 0
        %v367 = vsel %vm335, %v325, 0
        %v370 = vsel %vm335, %v326, 0
        %v373 = vsel %vm335, %v327, 0
        %375 = vmatprep.subr.mxu0 0.0
        %376 = vmatpush1.xpose.msra.mxu0 0.0
        %377 = vmatprep.subr.mxu0 0.0
        %378 = vmatpush1.xpose.msra.mxu0 0.0
        %379 = vmatprep.subr.mxu0 0.0
        %380 = vmatpush1.xpose.msra.mxu0 0.0
        %381 = vmatprep.subr.mxu0 0.0
        %382 = vmatpush1.xpose.msra.mxu0 0.0
        %383 = vmatprep.subr.mxu0 0.0
        %384 = vmatpush1.xpose.msra.mxu0 %v373
        %385 = vmatprep.subr.mxu0 0.0
        %386 = vmatpush1.xpose.msra.mxu0 %v370
        %387 = vmatprep.subr.mxu0 0.0
        %388 = vmatpush1.xpose.msra.mxu0 %v367
        %389 = vmatprep.subr.mxu0 0.0
        %390 = vmatpush1.xpose.msra.mxu0 %v364
        %391 = vmatprep.subr.mxu0 0.0
        %392 = vmatpush1.xpose.msra.mxu0 %v361
        %393 = vmatprep.subr.mxu0 0.0
        %394 = vmatpush1.xpose.msra.mxu0 %v358
        %395 = vmatprep.subr.mxu0 0.0
        %396 = vmatpush1.xpose.msra.mxu0 %v355
        %397 = vmatprep.subr.mxu0 0.0
        %398 = vmatpush1.xpose.msra.mxu0 %v352
        %399 = vmatprep.subr.mxu0 0.0
        %400 = vmatpush1.xpose.msra.mxu0 %v349
        %401 = vmatprep.subr.mxu0 0.0
        %402 = vmatpush1.xpose.msra.mxu0 %v346
        %403 = vmatprep.subr.mxu0 0.0
        %404 = vmatpush1.xpose.msra.mxu0 %v343
        %405 = vmatprep.subr.mxu0 0.0
        %406 = vmatpush1.xpose.msra.mxu0 %v340
        %407 = vmatprep.subr.mxu0 0.0
        %408 = vmatpush2.xpose.msra.mxu0 0.0
        %409 = vmatprep.subr.mxu0 0.0
        %410 = vmatpush2.xpose.msra.mxu0 0.0
        %411 = vmatprep.subr.mxu0 0.0
        %412 = vmatpush2.xpose.msra.mxu0 0.0
        %413 = vmatprep.subr.mxu0 0.0
        %414 = vmatpush2.xpose.msra.mxu0 0.0
        %415 = vmatprep.subr.mxu0 0.0
        %416 = vmatpush2.xpose.msra.mxu0 0.0
        %417 = vmatprep.subr.mxu0 0.0
        %418 = vmatpush2.xpose.msra.mxu0 0.0
        %419 = vmatprep.subr.mxu0 0.0
        %420 = vmatpush2.xpose.msra.mxu0 0.0
        %421 = vmatprep.subr.mxu0 0.0
        %422 = vmatpush2.xpose.msra.mxu0 0.0
        %423 = vmatprep.subr.mxu0 0.0
        %424 = vmatpush2.xpose.msra.mxu0 0.0
        %425 = vmatprep.subr.mxu0 0.0
        %426 = vmatpush2.xpose.msra.mxu0 0.0
        %427 = vmatprep.subr.mxu0 0.0
        %428 = vmatpush2.xpose.msra.mxu0 0.0
        %429 = vmatprep.subr.mxu0 0.0
        %430 = vmatpush2.xpose.msra.mxu0 0.0
        %431 = vmatprep.subr.mxu0 0.0
        %432 = vmatpush2.xpose.msra.mxu0 0.0
        %433 = vmatprep.subr.mxu0 0.0
        %434 = vmatpush2.xpose.msra.mxu0 0.0
        %435 = vmatprep.subr.mxu0 0.0
        %436 = vmatpush2.xpose.msra.mxu0 0.0
        %437 = vmatprep.subr.mxu0 0.0
        %438 = vmatpush2.xpose.msra.mxu0 0.0
        %439 = vmatprep.mubr.f32.mxu0 0.0
        %440 = vmatmul.mubr.f32.gmra.mxu0 %v337
        %v441 = vpop.f32.mrf.mxu0
        %v442 = vadd.f32 %v333, %v441
        %v443 = vpop.f32.mrf.mxu0
        %444 = vdwg.mxu0
        %v445 = vmul.f32 %v442, 0.35355338
        %v446 = vlaneseq
        %v447 = vshrl.u32 %v446, 7
        %v448 = vlaneseq
        %v449 = vand.u32 %v448, 127
        %vm450 = vcmp.lt.s32.totalorder %v449, 3
        %vm451 = vcmp.ge.s32.totalorder %v447, 3
        %vm452 = vcmp.le.s32.totalorder %v449, %v447
        %vm453 = vmand %vm451, %vm452
        %vm454 = vmor %vm450, %vm453
        %v455 = vsel %vm454, 1.0, 0.0
        %v456 = vld [vmem:[%s310] sm:$0x1]
        %v458 = vlaneseq
        %v459 = vshrl.u32 %v458, 7
        %v460 = vsub.s32 0, %v459
        %v461 = vrot.slane %v456, %v460
        %v463 = vmul.f32 %v455, %v461
        %v464 = vsub.f32 1.0, %v463
        %v465 = vmul.f32 %v464, -10000.0
        %467 = vrot.lane.b32.xlu0 %v442, 96
        %v468 = vpop.permute.xlu0 %467
        %vm469 = vcmask 64512
        %v471 = vsel %vm469, %v445, 0
        %v473 = vsel %vm469, %v468, 0
        %475 = vmatprep.subr.mxu0 0.0
        %476 = vmatpush1.xpose.msra.mxu0 0.0
        %477 = vmatprep.subr.mxu0 0.0
        %478 = vmatpush1.xpose.msra.mxu0 0.0
        %479 = vmatprep.subr.mxu0 0.0
        %480 = vmatpush1.xpose.msra.mxu0 0.0
        %481 = vmatprep.subr.mxu0 0.0
        %482 = vmatpush1.xpose.msra.mxu0 0.0
        %483 = vmatprep.subr.mxu0 0.0
        %484 = vmatpush1.xpose.msra.mxu0 0.0
        %485 = vmatprep.subr.mxu0 0.0
        %486 = vmatpush1.xpose.msra.mxu0 0.0
        %487 = vmatprep.subr.mxu0 0.0
        %488 = vmatpush1.xpose.msra.mxu0 0.0
        %489 = vmatprep.subr.mxu0 0.0
        %490 = vmatpush1.xpose.msra.mxu0 0.0
        %491 = vmatprep.subr.mxu0 0.0
        %492 = vmatpush1.xpose.msra.mxu0 0.0
        %493 = vmatprep.subr.mxu0 0.0
        %494 = vmatpush1.xpose.msra.mxu0 0.0
        %495 = vmatprep.subr.mxu0 0.0
        %496 = vmatpush1.xpose.msra.mxu0 0.0
        %497 = vmatprep.subr.mxu0 0.0
        %498 = vmatpush1.xpose.msra.mxu0 0.0
        %499 = vmatprep.subr.mxu0 0.0
        %500 = vmatpush1.xpose.msra.mxu0 0.0
        %501 = vmatprep.subr.mxu0 0.0
        %502 = vmatpush1.xpose.msra.mxu0 0.0
        %503 = vmatprep.subr.mxu0 0.0
        %504 = vmatpush1.xpose.msra.mxu0 0.0
        %505 = vmatprep.subr.mxu0 0.0
        %506 = vmatpush1.xpose.msra.mxu0 %v473
        %507 = vmatprep.subr.mxu0 0.0
        %508 = vmatpush2.xpose.msra.mxu0 0.0
        %509 = vmatprep.subr.mxu0 0.0
        %510 = vmatpush2.xpose.msra.mxu0 0.0
        %511 = vmatprep.subr.mxu0 0.0
        %512 = vmatpush2.xpose.msra.mxu0 0.0
        %513 = vmatprep.subr.mxu0 0.0
        %514 = vmatpush2.xpose.msra.mxu0 0.0
        %515 = vmatprep.subr.mxu0 0.0
        %516 = vmatpush2.xpose.msra.mxu0 0.0
        %517 = vmatprep.subr.mxu0 0.0
        %518 = vmatpush2.xpose.msra.mxu0 0.0
        %519 = vmatprep.subr.mxu0 0.0
        %520 = vmatpush2.xpose.msra.mxu0 0.0
        %521 = vmatprep.subr.mxu0 0.0
        %522 = vmatpush2.xpose.msra.mxu0 0.0
        %523 = vmatprep.subr.mxu0 0.0
        %524 = vmatpush2.xpose.msra.mxu0 0.0
        %525 = vmatprep.subr.mxu0 0.0
        %526 = vmatpush2.xpose.msra.mxu0 0.0
        %527 = vmatprep.subr.mxu0 0.0
        %528 = vmatpush2.xpose.msra.mxu0 0.0
        %529 = vmatprep.subr.mxu0 0.0
        %530 = vmatpush2.xpose.msra.mxu0 0.0
        %531 = vmatprep.subr.mxu0 0.0
        %532 = vmatpush2.xpose.msra.mxu0 0.0
        %533 = vmatprep.subr.mxu0 0.0
        %534 = vmatpush2.xpose.msra.mxu0 0.0
        %535 = vmatprep.subr.mxu0 0.0
        %536 = vmatpush2.xpose.msra.mxu0 0.0
        %537 = vmatprep.subr.mxu0 0.0
        %538 = vmatpush2.xpose.msra.mxu0 0.0
        %539 = vmatprep.mubr.f32.mxu0 0.0
        %540 = vmatmul.mubr.f32.gmra.mxu0 %v471
        %v541 = vpop.f32.mrf.mxu0
        %v542 = vadd.f32 %v465, %v541
        %v543 = vpop.f32.mrf.mxu0
        %544 = vdwg.mxu0
        %v545 = vsel %vm469, %v542, -inf
        %546 = vmax.xlane.f32.xlu0 %v545
        %v547 = vpop.xlane.xlu0 %546
        %v548 = vsub.f32 %v542, %v547
        %v549 = vmul.f32 %v548, 1.442695
        %v550 = vpow.pop %v549
        %v551 = vsel %vm469, %v550, 0.0
        %552 = vadd.xlane.f32.xlu0 %v551
        %v553 = vpop.xlane.xlu0 %552
        %v554 = vrcp.pop %v553
        %v555 = vmul.f32 %v550, %v554
        %556 = vrot.lane.b32.xlu0 %v442, 64
        %v557 = vpop.permute.xlu0 %556
        %v560 = vsel %vm469, %v555, 0
        %562 = vmatprep.subr.mxu0 0.0
        %563 = vmatpush1.msra.mxu0 0.0
        %564 = vmatprep.subr.mxu0 0.0
        %565 = vmatpush1.msra.mxu0 0.0
        %566 = vmatprep.subr.mxu0 0.0
        %567 = vmatpush1.msra.mxu0 0.0
        %568 = vmatprep.subr.mxu0 0.0
        %569 = vmatpush1.msra.mxu0 0.0
        %570 = vmatprep.subr.mxu0 0.0
        %571 = vmatpush1.msra.mxu0 0.0
        %572 = vmatprep.subr.mxu0 0.0
        %573 = vmatpush1.msra.mxu0 0.0
        %574 = vmatprep.subr.mxu0 0.0
        %575 = vmatpush1.msra.mxu0 0.0
        %576 = vmatprep.subr.mxu0 0.0
        %577 = vmatpush1.msra.mxu0 0.0
        %578 = vmatprep.subr.mxu0 0.0
        %579 = vmatpush1.msra.mxu0 0.0
        %580 = vmatprep.subr.mxu0 0.0
        %581 = vmatpush1.msra.mxu0 0.0
        %582 = vmatprep.subr.mxu0 0.0
        %583 = vmatpush1.msra.mxu0 0.0
        %584 = vmatprep.subr.mxu0 0.0
        %585 = vmatpush1.msra.mxu0 0.0
        %586 = vmatprep.subr.mxu0 0.0
        %587 = vmatpush1.msra.mxu0 0.0
        %588 = vmatprep.subr.mxu0 0.0
        %589 = vmatpush1.msra.mxu0 0.0
        %590 = vmatprep.subr.mxu0 0.0
        %591 = vmatpush1.msra.mxu0 0.0
        %592 = vmatprep.subr.mxu0 0.0
        %593 = vmatpush1.msra.mxu0 %v557
        %594 = vmatprep.subr.mxu0 0.0
        %595 = vmatpush2.msra.mxu0 0.0
        %596 = vmatprep.subr.mxu0 0.0
        %597 = vmatpush2.msra.mxu0 0.0
        %598 = vmatprep.subr.mxu0 0.0
        %599 = vmatpush2.msra.mxu0 0.0
        %600 = vmatprep.subr.mxu0 0.0
        %601 = vmatpush2.msra.mxu0 0.0
        %602 = vmatprep.subr.mxu0 0.0
        %603 = vmatpush2.msra.mxu0 0.0
        %604 = vmatprep.subr.mxu0 0.0
        %605 = vmatpush2.msra.mxu0 0.0
        %606 = vmatprep.subr.mxu0 0.0
        %607 = vmatpush2.msra.mxu0 0.0
        %608 = vmatprep.subr.mxu0 0.0
        %609 = vmatpush2.msra.mxu0 0.0
        %610 = vmatprep.subr.mxu0 0.0
        %611 = vmatpush2.msra.mxu0 0.0
        %612 = vmatprep.subr.mxu0 0.0
        %613 = vmatpush2.msra.mxu0 0.0
        %614 = vmatprep.subr.mxu0 0.0
        %615 = vmatpush2.msra.mxu0 0.0
        %616 = vmatprep.subr.mxu0 0.0
        %617 = vmatpush2.msra.mxu0 0.0
        %618 = vmatprep.subr.mxu0 0.0
        %619 = vmatpush2.msra.mxu0 0.0
        %620 = vmatprep.subr.mxu0 0.0
        %621 = vmatpush2.msra.mxu0 0.0
        %622 = vmatprep.subr.mxu0 0.0
        %623 = vmatpush2.msra.mxu0 0.0
        %624 = vmatprep.subr.mxu0 0.0
        %625 = vmatpush2.msra.mxu0 0.0
        %626 = vmatprep.mubr.f32.mxu0 0.0
        %627 = vmatmul.mubr.f32.gmra.mxu0 %v560
        %v628 = vpop.f32.mrf.mxu0
        %v629 = vadd.f32 0.0, %v628
        %v630 = vpop.f32.mrf.mxu0
        %631 = vdwg.mxu0
        %632 = vst.msk [vmem:[#allocation2] sm:$0xff] %vm469, %v629
        %633 = vrot.lane.b32.xlu0 %v445, 120
        %v634 = vpop.permute.xlu0 %633
        %635 = vrot.lane.b32.xlu0 %v442, 88
        %v636 = vpop.permute.xlu0 %635
        %v637 = vsel %vm469, %v634, 0
        %v639 = vsel %vm469, %v636, 0
        %641 = vmatprep.subr.mxu0 0.0
        %642 = vmatpush1.xpose.msra.mxu0 0.0
        %643 = vmatprep.subr.mxu0 0.0
        %644 = vmatpush1.xpose.msra.mxu0 0.0
        %645 = vmatprep.subr.mxu0 0.0
        %646 = vmatpush1.xpose.msra.mxu0 0.0
        %647 = vmatprep.subr.mxu0 0.0
        %648 = vmatpush1.xpose.msra.mxu0 0.0
        %649 = vmatprep.subr.mxu0 0.0
        %650 = vmatpush1.xpose.msra.mxu0 0.0
        %651 = vmatprep.subr.mxu0 0.0
        %652 = vmatpush1.xpose.msra.mxu0 0.0
        %653 = vmatprep.subr.mxu0 0.0
        %654 = vmatpush1.xpose.msra.mxu0 0.0
        %655 = vmatprep.subr.mxu0 0.0
        %656 = vmatpush1.xpose.msra.mxu0 0.0
        %657 = vmatprep.subr.mxu0 0.0
        %658 = vmatpush1.xpose.msra.mxu0 0.0
        %659 = vmatprep.subr.mxu0 0.0
        %660 = vmatpush1.xpose.msra.mxu0 0.0
        %661 = vmatprep.subr.mxu0 0.0
        %662 = vmatpush1.xpose.msra.mxu0 0.0
        %663 = vmatprep.subr.mxu0 0.0
        %664 = vmatpush1.xpose.msra.mxu0 0.0
        %665 = vmatprep.subr.mxu0 0.0
        %666 = vmatpush1.xpose.msra.mxu0 0.0
        %667 = vmatprep.subr.mxu0 0.0
        %668 = vmatpush1.xpose.msra.mxu0 0.0
        %669 = vmatprep.subr.mxu0 0.0
        %670 = vmatpush1.xpose.msra.mxu0 0.0
        %671 = vmatprep.subr.mxu0 0.0
        %672 = vmatpush1.xpose.msra.mxu0 %v639
        %673 = vmatprep.subr.mxu0 0.0
        %674 = vmatpush2.xpose.msra.mxu0 0.0
        %675 = vmatprep.subr.mxu0 0.0
        %676 = vmatpush2.xpose.msra.mxu0 0.0
        %677 = vmatprep.subr.mxu0 0.0
        %678 = vmatpush2.xpose.msra.mxu0 0.0
        %679 = vmatprep.subr.mxu0 0.0
        %680 = vmatpush2.xpose.msra.mxu0 0.0
        %681 = vmatprep.subr.mxu0 0.0
        %682 = vmatpush2.xpose.msra.mxu0 0.0
        %683 = vmatprep.subr.mxu0 0.0
        %684 = vmatpush2.xpose.msra.mxu0 0.0
        %685 = vmatprep.subr.mxu0 0.0
        %686 = vmatpush2.xpose.msra.mxu0 0.0
        %687 = vmatprep.subr.mxu0 0.0
        %688 = vmatpush2.xpose.msra.mxu0 0.0
        %689 = vmatprep.subr.mxu0 0.0
        %690 = vmatpush2.xpose.msra.mxu0 0.0
        %691 = vmatprep.subr.mxu0 0.0
        %692 = vmatpush2.xpose.msra.mxu0 0.0
        %693 = vmatprep.subr.mxu0 0.0
        %694 = vmatpush2.xpose.msra.mxu0 0.0
        %695 = vmatprep.subr.mxu0 0.0
        %696 = vmatpush2.xpose.msra.mxu0 0.0
        %697 = vmatprep.subr.mxu0 0.0
        %698 = vmatpush2.xpose.msra.mxu0 0.0
        %699 = vmatprep.subr.mxu0 0.0
        %700 = vmatpush2.xpose.msra.mxu0 0.0
        %701 = vmatprep.subr.mxu0 0.0
        %702 = vmatpush2.xpose.msra.mxu0 0.0
        %703 = vmatprep.subr.mxu0 0.0
        %704 = vmatpush2.xpose.msra.mxu0 0.0
        %705 = vmatprep.mubr.f32.mxu0 0.0
        %706 = vmatmul.mubr.f32.gmra.mxu0 %v637
        %v707 = vpop.f32.mrf.mxu0
        %v708 = vadd.f32 %v465, %v707
        %v709 = vpop.f32.mrf.mxu0
        %710 = vdwg.mxu0
        %v711 = vsel %vm469, %v708, -inf
        %712 = vmax.xlane.f32.xlu0 %v711
        %v713 = vpop.xlane.xlu0 %712
        %v714 = vsub.f32 %v708, %v713
        %v715 = vmul.f32 %v714, 1.442695
        %v716 = vpow.pop %v715
        %v717 = vsel %vm469, %v716, 0.0
        %718 = vadd.xlane.f32.xlu0 %v717
        %v719 = vpop.xlane.xlu0 %718
        %v720 = vrcp.pop %v719
        %v721 = vmul.f32 %v716, %v720
        %722 = vrot.lane.b32.xlu0 %v442, 56
        %v723 = vpop.permute.xlu0 %722
        %v726 = vsel %vm469, %v721, 0
        %728 = vmatprep.subr.mxu0 0.0
        %729 = vmatpush1.msra.mxu0 0.0
        %730 = vmatprep.subr.mxu0 0.0
        %731 = vmatpush1.msra.mxu0 0.0
        %732 = vmatprep.subr.mxu0 0.0
        %733 = vmatpush1.msra.mxu0 0.0
        %734 = vmatprep.subr.mxu0 0.0
        %735 = vmatpush1.msra.mxu0 0.0
        %736 = vmatprep.subr.mxu0 0.0
        %737 = vmatpush1.msra.mxu0 0.0
        %738 = vmatprep.subr.mxu0 0.0
        %739 = vmatpush1.msra.mxu0 0.0
        %740 = vmatprep.subr.mxu0 0.0
        %741 = vmatpush1.msra.mxu0 0.0
        %742 = vmatprep.subr.mxu0 0.0
        %743 = vmatpush1.msra.mxu0 0.0
        %744 = vmatprep.subr.mxu0 0.0
        %745 = vmatpush1.msra.mxu0 0.0
        %746 = vmatprep.subr.mxu0 0.0
        %747 = vmatpush1.msra.mxu0 0.0
        %748 = vmatprep.subr.mxu0 0.0
        %749 = vmatpush1.msra.mxu0 0.0
        %750 = vmatprep.subr.mxu0 0.0
        %751 = vmatpush1.msra.mxu0 0.0
        %752 = vmatprep.subr.mxu0 0.0
        %753 = vmatpush1.msra.mxu0 0.0
        %754 = vmatprep.subr.mxu0 0.0
        %755 = vmatpush1.msra.mxu0 0.0
        %756 = vmatprep.subr.mxu0 0.0
        %757 = vmatpush1.msra.mxu0 0.0
        %758 = vmatprep.subr.mxu0 0.0
        %759 = vmatpush1.msra.mxu0 %v723
        %760 = vmatprep.subr.mxu0 0.0
        %761 = vmatpush2.msra.mxu0 0.0
        %762 = vmatprep.subr.mxu0 0.0
        %763 = vmatpush2.msra.mxu0 0.0
        %764 = vmatprep.subr.mxu0 0.0
        %765 = vmatpush2.msra.mxu0 0.0
        %766 = vmatprep.subr.mxu0 0.0
        %767 = vmatpush2.msra.mxu0 0.0
        %768 = vmatprep.subr.mxu0 0.0
        %769 = vmatpush2.msra.mxu0 0.0
        %770 = vmatprep.subr.mxu0 0.0
        %771 = vmatpush2.msra.mxu0 0.0
        %772 = vmatprep.subr.mxu0 0.0
        %773 = vmatpush2.msra.mxu0 0.0
        %774 = vmatprep.subr.mxu0 0.0
        %775 = vmatpush2.msra.mxu0 0.0
        %776 = vmatprep.subr.mxu0 0.0
        %777 = vmatpush2.msra.mxu0 0.0
        %778 = vmatprep.subr.mxu0 0.0
        %779 = vmatpush2.msra.mxu0 0.0
        %780 = vmatprep.subr.mxu0 0.0
        %781 = vmatpush2.msra.mxu0 0.0
        %782 = vmatprep.subr.mxu0 0.0
        %783 = vmatpush2.msra.mxu0 0.0
        %784 = vmatprep.subr.mxu0 0.0
        %785 = vmatpush2.msra.mxu0 0.0
        %786 = vmatprep.subr.mxu0 0.0
        %787 = vmatpush2.msra.mxu0 0.0
        %788 = vmatprep.subr.mxu0 0.0
        %789 = vmatpush2.msra.mxu0 0.0
        %790 = vmatprep.subr.mxu0 0.0
        %791 = vmatpush2.msra.mxu0 0.0
        %792 = vmatprep.mubr.f32.mxu0 0.0
        %793 = vmatmul.mubr.f32.gmra.mxu0 %v726
        %v794 = vpop.f32.mrf.mxu0
        %v795 = vadd.f32 0.0, %v794
        %v796 = vpop.f32.mrf.mxu0
        %797 = vdwg.mxu0
        %799 = vrot.lane.b32.xlu0 %v795, 8
        %v800 = vpop.permute.xlu0 %799
        %vm802 = vcmask 130112
        %803 = vst.msk [vmem:[#allocation2] sm:$0xff] %vm802, %v800
        %804 = vrot.lane.b32.xlu0 %v445, 112
        %v805 = vpop.permute.xlu0 %804
        %806 = vrot.lane.b32.xlu0 %v442, 80
        %v807 = vpop.permute.xlu0 %806
        %v808 = vsel %vm469, %v805, 0
        %v810 = vsel %vm469, %v807, 0
        %812 = vmatprep.subr.mxu0 0.0
        %813 = vmatpush1.xpose.msra.mxu0 0.0
        %814 = vmatprep.subr.mxu0 0.0
        %815 = vmatpush1.xpose.msra.mxu0 0.0
        %816 = vmatprep.subr.mxu0 0.0
        %817 = vmatpush1.xpose.msra.mxu0 0.0
        %818 = vmatprep.subr.mxu0 0.0
        %819 = vmatpush1.xpose.msra.mxu0 0.0
        %820 = vmatprep.subr.mxu0 0.0
        %821 = vmatpush1.xpose.msra.mxu0 0.0
        %822 = vmatprep.subr.mxu0 0.0
        %823 = vmatpush1.xpose.msra.mxu0 0.0
        %824 = vmatprep.subr.mxu0 0.0
        %825 = vmatpush1.xpose.msra.mxu0 0.0
        %826 = vmatprep.subr.mxu0 0.0
        %827 = vmatpush1.xpose.msra.mxu0 0.0
        %828 = vmatprep.subr.mxu0 0.0
        %829 = vmatpush1.xpose.msra.mxu0 0.0
        %830 = vmatprep.subr.mxu0 0.0
        %831 = vmatpush1.xpose.msra.mxu0 0.0
        %832 = vmatprep.subr.mxu0 0.0
        %833 = vmatpush1.xpose.msra.mxu0 0.0
        %834 = vmatprep.subr.mxu0 0.0
        %835 = vmatpush1.xpose.msra.mxu0 0.0
        %836 = vmatprep.subr.mxu0 0.0
        %837 = vmatpush1.xpose.msra.mxu0 0.0
        %838 = vmatprep.subr.mxu0 0.0
        %839 = vmatpush1.xpose.msra.mxu0 0.0
        %840 = vmatprep.subr.mxu0 0.0
        %841 = vmatpush1.xpose.msra.mxu0 0.0
        %842 = vmatprep.subr.mxu0 0.0
        %843 = vmatpush1.xpose.msra.mxu0 %v810
        %844 = vmatprep.subr.mxu0 0.0
        %845 = vmatpush2.xpose.msra.mxu0 0.0
        %846 = vmatprep.subr.mxu0 0.0
        %847 = vmatpush2.xpose.msra.mxu0 0.0
        %848 = vmatprep.subr.mxu0 0.0
        %849 = vmatpush2.xpose.msra.mxu0 0.0
        %850 = vmatprep.subr.mxu0 0.0
        %851 = vmatpush2.xpose.msra.mxu0 0.0
        %852 = vmatprep.subr.mxu0 0.0
        %853 = vmatpush2.xpose.msra.mxu0 0.0
        %854 = vmatprep.subr.mxu0 0.0
        %855 = vmatpush2.xpose.msra.mxu0 0.0
        %856 = vmatprep.subr.mxu0 0.0
        %857 = vmatpush2.xpose.msra.mxu0 0.0
        %858 = vmatprep.subr.mxu0 0.0
        %859 = vmatpush2.xpose.msra.mxu0 0.0
        %860 = vmatprep.subr.mxu0 0.0
        %861 = vmatpush2.xpose.msra.mxu0 0.0
        %862 = vmatprep.subr.mxu0 0.0
        %863 = vmatpush2.xpose.msra.mxu0 0.0
        %864 = vmatprep.subr.mxu0 0.0
        %865 = vmatpush2.xpose.msra.mxu0 0.0
        %866 = vmatprep.subr.mxu0 0.0
        %867 = vmatpush2.xpose.msra.mxu0 0.0
        %868 = vmatprep.subr.mxu0 0.0
        %869 = vmatpush2.xpose.msra.mxu0 0.0
        %870 = vmatprep.subr.mxu0 0.0
        %871 = vmatpush2.xpose.msra.mxu0 0.0
        %872 = vmatprep.subr.mxu0 0.0
        %873 = vmatpush2.xpose.msra.mxu0 0.0
        %874 = vmatprep.subr.mxu0 0.0
        %875 = vmatpush2.xpose.msra.mxu0 0.0
        %876 = vmatprep.mubr.f32.mxu0 0.0
        %877 = vmatmul.mubr.f32.gmra.mxu0 %v808
        %v878 = vpop.f32.mrf.mxu0
        %v879 = vadd.f32 %v465, %v878
        %v880 = vpop.f32.mrf.mxu0
        %881 = vdwg.mxu0
        %v882 = vsel %vm469, %v879, -inf
        %883 = vmax.xlane.f32.xlu0 %v882
        %v884 = vpop.xlane.xlu0 %883
        %v885 = vsub.f32 %v879, %v884
        %v886 = vmul.f32 %v885, 1.442695
        %v887 = vpow.pop %v886
        %v888 = vsel %vm469, %v887, 0.0
        %889 = vadd.xlane.f32.xlu0 %v888
        %v890 = vpop.xlane.xlu0 %889
        %v891 = vrcp.pop %v890
        %v892 = vmul.f32 %v887, %v891
        %893 = vrot.lane.b32.xlu0 %v442, 48
        %v894 = vpop.permute.xlu0 %893
        %v897 = vsel %vm469, %v892, 0
        %899 = vmatprep.subr.mxu0 0.0
        %900 = vmatpush1.msra.mxu0 0.0
        %901 = vmatprep.subr.mxu0 0.0
        %902 = vmatpush1.msra.mxu0 0.0
        %903 = vmatprep.subr.mxu0 0.0
        %904 = vmatpush1.msra.mxu0 0.0
        %905 = vmatprep.subr.mxu0 0.0
        %906 = vmatpush1.msra.mxu0 0.0
        %907 = vmatprep.subr.mxu0 0.0
        %908 = vmatpush1.msra.mxu0 0.0
        %909 = vmatprep.subr.mxu0 0.0
        %910 = vmatpush1.msra.mxu0 0.0
        %911 = vmatprep.subr.mxu0 0.0
        %912 = vmatpush1.msra.mxu0 0.0
        %913 = vmatprep.subr.mxu0 0.0
        %914 = vmatpush1.msra.mxu0 0.0
        %915 = vmatprep.subr.mxu0 0.0
        %916 = vmatpush1.msra.mxu0 0.0
        %917 = vmatprep.subr.mxu0 0.0
        %918 = vmatpush1.msra.mxu0 0.0
        %919 = vmatprep.subr.mxu0 0.0
        %920 = vmatpush1.msra.mxu0 0.0
        %921 = vmatprep.subr.mxu0 0.0
        %922 = vmatpush1.msra.mxu0 0.0
        %923 = vmatprep.subr.mxu0 0.0
        %924 = vmatpush1.msra.mxu0 0.0
        %925 = vmatprep.subr.mxu0 0.0
        %926 = vmatpush1.msra.mxu0 0.0
        %927 = vmatprep.subr.mxu0 0.0
        %928 = vmatpush1.msra.mxu0 0.0
        %929 = vmatprep.subr.mxu0 0.0
        %930 = vmatpush1.msra.mxu0 %v894
        %931 = vmatprep.subr.mxu0 0.0
        %932 = vmatpush2.msra.mxu0 0.0
        %933 = vmatprep.subr.mxu0 0.0
        %934 = vmatpush2.msra.mxu0 0.0
        %935 = vmatprep.subr.mxu0 0.0
        %936 = vmatpush2.msra.mxu0 0.0
        %937 = vmatprep.subr.mxu0 0.0
        %938 = vmatpush2.msra.mxu0 0.0
        %939 = vmatprep.subr.mxu0 0.0
        %940 = vmatpush2.msra.mxu0 0.0
        %941 = vmatprep.subr.mxu0 0.0
        %942 = vmatpush2.msra.mxu0 0.0
        %943 = vmatprep.subr.mxu0 0.0
        %944 = vmatpush2.msra.mxu0 0.0
        %945 = vmatprep.subr.mxu0 0.0
        %946 = vmatpush2.msra.mxu0 0.0
        %947 = vmatprep.subr.mxu0 0.0
        %948 = vmatpush2.msra.mxu0 0.0
        %949 = vmatprep.subr.mxu0 0.0
        %950 = vmatpush2.msra.mxu0 0.0
        %951 = vmatprep.subr.mxu0 0.0
        %952 = vmatpush2.msra.mxu0 0.0
        %953 = vmatprep.subr.mxu0 0.0
        %954 = vmatpush2.msra.mxu0 0.0
        %955 = vmatprep.subr.mxu0 0.0
        %956 = vmatpush2.msra.mxu0 0.0
        %957 = vmatprep.subr.mxu0 0.0
        %958 = vmatpush2.msra.mxu0 0.0
        %959 = vmatprep.subr.mxu0 0.0
        %960 = vmatpush2.msra.mxu0 0.0
        %961 = vmatprep.subr.mxu0 0.0
        %962 = vmatpush2.msra.mxu0 0.0
        %963 = vmatprep.mubr.f32.mxu0 0.0
        %964 = vmatmul.mubr.f32.gmra.mxu0 %v897
        %v965 = vpop.f32.mrf.mxu0
        %v966 = vadd.f32 0.0, %v965
        %v967 = vpop.f32.mrf.mxu0
        %968 = vdwg.mxu0
        %970 = vrot.lane.b32.xlu0 %v966, 16
        %v971 = vpop.permute.xlu0 %970
        %vm973 = vcmask 195712
        %974 = vst.msk [vmem:[#allocation2] sm:$0xff] %vm973, %v971
        %975 = vrot.lane.b32.xlu0 %v445, 104
        %v976 = vpop.permute.xlu0 %975
        %977 = vrot.lane.b32.xlu0 %v442, 72
        %v978 = vpop.permute.xlu0 %977
        %v979 = vsel %vm469, %v976, 0
        %v981 = vsel %vm469, %v978, 0
        %983 = vmatprep.subr.mxu0 0.0
        %984 = vmatpush1.xpose.msra.mxu0 0.0
        %985 = vmatprep.subr.mxu0 0.0
        %986 = vmatpush1.xpose.msra.mxu0 0.0
        %987 = vmatprep.subr.mxu0 0.0
        %988 = vmatpush1.xpose.msra.mxu0 0.0
        %989 = vmatprep.subr.mxu0 0.0
        %990 = vmatpush1.xpose.msra.mxu0 0.0
        %991 = vmatprep.subr.mxu0 0.0
        %992 = vmatpush1.xpose.msra.mxu0 0.0
        %993 = vmatprep.subr.mxu0 0.0
        %994 = vmatpush1.xpose.msra.mxu0 0.0
        %995 = vmatprep.subr.mxu0 0.0
        %996 = vmatpush1.xpose.msra.mxu0 0.0
        %997 = vmatprep.subr.mxu0 0.0
        %998 = vmatpush1.xpose.msra.mxu0 0.0
        %999 = vmatprep.subr.mxu0 0.0
        %1000 = vmatpush1.xpose.msra.mxu0 0.0
        %1001 = vmatprep.subr.mxu0 0.0
        %1002 = vmatpush1.xpose.msra.mxu0 0.0
        %1003 = vmatprep.subr.mxu0 0.0
        %1004 = vmatpush1.xpose.msra.mxu0 0.0
        %1005 = vmatprep.subr.mxu0 0.0
        %1006 = vmatpush1.xpose.msra.mxu0 0.0
        %1007 = vmatprep.subr.mxu0 0.0
        %1008 = vmatpush1.xpose.msra.mxu0 0.0
        %1009 = vmatprep.subr.mxu0 0.0
        %1010 = vmatpush1.xpose.msra.mxu0 0.0
        %1011 = vmatprep.subr.mxu0 0.0
        %1012 = vmatpush1.xpose.msra.mxu0 0.0
        %1013 = vmatprep.subr.mxu0 0.0
        %1014 = vmatpush1.xpose.msra.mxu0 %v981
        %1015 = vmatprep.subr.mxu0 0.0
        %1016 = vmatpush2.xpose.msra.mxu0 0.0
        %1017 = vmatprep.subr.mxu0 0.0
        %1018 = vmatpush2.xpose.msra.mxu0 0.0
        %1019 = vmatprep.subr.mxu0 0.0
        %1020 = vmatpush2.xpose.msra.mxu0 0.0
        %1021 = vmatprep.subr.mxu0 0.0
        %1022 = vmatpush2.xpose.msra.mxu0 0.0
        %1023 = vmatprep.subr.mxu0 0.0
        %1024 = vmatpush2.xpose.msra.mxu0 0.0
        %1025 = vmatprep.subr.mxu0 0.0
        %1026 = vmatpush2.xpose.msra.mxu0 0.0
        %1027 = vmatprep.subr.mxu0 0.0
        %1028 = vmatpush2.xpose.msra.mxu0 0.0
        %1029 = vmatprep.subr.mxu0 0.0
        %1030 = vmatpush2.xpose.msra.mxu0 0.0
        %1031 = vmatprep.subr.mxu0 0.0
        %1032 = vmatpush2.xpose.msra.mxu0 0.0
        %1033 = vmatprep.subr.mxu0 0.0
        %1034 = vmatpush2.xpose.msra.mxu0 0.0
        %1035 = vmatprep.subr.mxu0 0.0
        %1036 = vmatpush2.xpose.msra.mxu0 0.0
        %1037 = vmatprep.subr.mxu0 0.0
        %1038 = vmatpush2.xpose.msra.mxu0 0.0
        %1039 = vmatprep.subr.mxu0 0.0
        %1040 = vmatpush2.xpose.msra.mxu0 0.0
        %1041 = vmatprep.subr.mxu0 0.0
        %1042 = vmatpush2.xpose.msra.mxu0 0.0
        %1043 = vmatprep.subr.mxu0 0.0
        %1044 = vmatpush2.xpose.msra.mxu0 0.0
        %1045 = vmatprep.subr.mxu0 0.0
        %1046 = vmatpush2.xpose.msra.mxu0 0.0
        %1047 = vmatprep.mubr.f32.mxu0 0.0
        %1048 = vmatmul.mubr.f32.gmra.mxu0 %v979
        %v1049 = vpop.f32.mrf.mxu0
        %v1050 = vadd.f32 %v465, %v1049
        %v1051 = vpop.f32.mrf.mxu0
        %1052 = vdwg.mxu0
        %v1053 = vsel %vm469, %v1050, -inf
        %1054 = vmax.xlane.f32.xlu0 %v1053
        %v1055 = vpop.xlane.xlu0 %1054
        %v1056 = vsub.f32 %v1050, %v1055
        %v1057 = vmul.f32 %v1056, 1.442695
        %v1058 = vpow.pop %v1057
        %v1059 = vsel %vm469, %v1058, 0.0
        %1060 = vadd.xlane.f32.xlu0 %v1059
        %v1061 = vpop.xlane.xlu0 %1060
        %v1062 = vrcp.pop %v1061
        %v1063 = vmul.f32 %v1058, %v1062
        %1064 = vrot.lane.b32.xlu0 %v442, 40
        %v1065 = vpop.permute.xlu0 %1064
        %v1068 = vsel %vm469, %v1063, 0
        %1070 = vmatprep.subr.mxu0 0.0
        %1071 = vmatpush1.msra.mxu0 0.0
        %1072 = vmatprep.subr.mxu0 0.0
        %1073 = vmatpush1.msra.mxu0 0.0
        %1074 = vmatprep.subr.mxu0 0.0
        %1075 = vmatpush1.msra.mxu0 0.0
        %1076 = vmatprep.subr.mxu0 0.0
        %1077 = vmatpush1.msra.mxu0 0.0
        %1078 = vmatprep.subr.mxu0 0.0
        %1079 = vmatpush1.msra.mxu0 0.0
        %1080 = vmatprep.subr.mxu0 0.0
        %1081 = vmatpush1.msra.mxu0 0.0
        %1082 = vmatprep.subr.mxu0 0.0
        %1083 = vmatpush1.msra.mxu0 0.0
        %1084 = vmatprep.subr.mxu0 0.0
        %1085 = vmatpush1.msra.mxu0 0.0
        %1086 = vmatprep.subr.mxu0 0.0
        %1087 = vmatpush1.msra.mxu0 0.0
        %1088 = vmatprep.subr.mxu0 0.0
        %1089 = vmatpush1.msra.mxu0 0.0
        %1090 = vmatprep.subr.mxu0 0.0
        %1091 = vmatpush1.msra.mxu0 0.0
        %1092 = vmatprep.subr.mxu0 0.0
        %1093 = vmatpush1.msra.mxu0 0.0
        %1094 = vmatprep.subr.mxu0 0.0
        %1095 = vmatpush1.msra.mxu0 0.0
        %1096 = vmatprep.subr.mxu0 0.0
        %1097 = vmatpush1.msra.mxu0 0.0
        %1098 = vmatprep.subr.mxu0 0.0
        %1099 = vmatpush1.msra.mxu0 0.0
        %1100 = vmatprep.subr.mxu0 0.0
        %1101 = vmatpush1.msra.mxu0 %v1065
        %1102 = vmatprep.subr.mxu0 0.0
        %1103 = vmatpush2.msra.mxu0 0.0
        %1104 = vmatprep.subr.mxu0 0.0
        %1105 = vmatpush2.msra.mxu0 0.0
        %1106 = vmatprep.subr.mxu0 0.0
        %1107 = vmatpush2.msra.mxu0 0.0
        %1108 = vmatprep.subr.mxu0 0.0
        %1109 = vmatpush2.msra.mxu0 0.0
        %1110 = vmatprep.subr.mxu0 0.0
        %1111 = vmatpush2.msra.mxu0 0.0
        %1112 = vmatprep.subr.mxu0 0.0
        %1113 = vmatpush2.msra.mxu0 0.0
        %1114 = vmatprep.subr.mxu0 0.0
        %1115 = vmatpush2.msra.mxu0 0.0
        %1116 = vmatprep.subr.mxu0 0.0
        %1117 = vmatpush2.msra.mxu0 0.0
        %1118 = vmatprep.subr.mxu0 0.0
        %1119 = vmatpush2.msra.mxu0 0.0
        %1120 = vmatprep.subr.mxu0 0.0
        %1121 = vmatpush2.msra.mxu0 0.0
        %1122 = vmatprep.subr.mxu0 0.0
        %1123 = vmatpush2.msra.mxu0 0.0
        %1124 = vmatprep.subr.mxu0 0.0
        %1125 = vmatpush2.msra.mxu0 0.0
        %1126 = vmatprep.subr.mxu0 0.0
        %1127 = vmatpush2.msra.mxu0 0.0
        %1128 = vmatprep.subr.mxu0 0.0
        %1129 = vmatpush2.msra.mxu0 0.0
        %1130 = vmatprep.subr.mxu0 0.0
        %1131 = vmatpush2.msra.mxu0 0.0
        %1132 = vmatprep.subr.mxu0 0.0
        %1133 = vmatpush2.msra.mxu0 0.0
        %1134 = vmatprep.mubr.f32.mxu0 0.0
        %1135 = vmatmul.mubr.f32.gmra.mxu0 %v1068
        %v1136 = vpop.f32.mrf.mxu0
        %v1137 = vadd.f32 0.0, %v1136
        %v1138 = vpop.f32.mrf.mxu0
        %1139 = vdwg.mxu0
        %1141 = vrot.lane.b32.xlu0 %v1137, 24
        %v1142 = vpop.permute.xlu0 %1141
        %vm1144 = vcmask 261312
        %1145 = vst.msk [vmem:[#allocation2] sm:$0xff] %vm1144, %v1142
        %v1146 = vld [vmem:[#allocation2] sm:$0xff]
        %v1147 = vld [vmem:[%s4] sm:$0xff]
        %v1148 = vld [vmem:[%s4 + $0x8] sm:$0xff]
        %v1149 = vld [vmem:[%s4 + $0x10] sm:$0xff]
        %v1150 = vld [vmem:[%s4 + $0x18] sm:$0xff]
        %v1151 = vld [vmem:[%s5] sm:$0x1]
        %v1153 = vlaneseq
        %v1154 = vshrl.u32 %v1153, 7
        %v1155 = vsub.s32 0, %v1154
        %v1156 = vrot.slane %v1151, %v1155
        %v1159 = vsel %vm335, %v1146, 0
        %v1162 = vsel %vm335, %v1147, 0
        %v1165 = vsel %vm335, %v1148, 0
        %v1168 = vsel %vm335, %v1149, 0
        %v1171 = vsel %vm335, %v1150, 0
        %1173 = vmatprep.subr.mxu0 0.0
        %1174 = vmatpush1.xpose.msra.mxu0 0.0
        %1175 = vmatprep.subr.mxu0 0.0
        %1176 = vmatpush1.xpose.msra.mxu0 0.0
        %1177 = vmatprep.subr.mxu0 0.0
        %1178 = vmatpush1.xpose.msra.mxu0 0.0
        %1179 = vmatprep.subr.mxu0 0.0
        %1180 = vmatpush1.xpose.msra.mxu0 0.0
        %1181 = vmatprep.subr.mxu0 0.0
        %1182 = vmatpush1.xpose.msra.mxu0 0.0
        %1183 = vmatprep.subr.mxu0 0.0
        %1184 = vmatpush1.xpose.msra.mxu0 0.0
        %1185 = vmatprep.subr.mxu0 0.0
        %1186 = vmatpush1.xpose.msra.mxu0 0.0
        %1187 = vmatprep.subr.mxu0 0.0
        %1188 = vmatpush1.xpose.msra.mxu0 0.0
        %1189 = vmatprep.subr.mxu0 0.0
        %1190 = vmatpush1.xpose.msra.mxu0 0.0
        %1191 = vmatprep.subr.mxu0 0.0
        %1192 = vmatpush1.xpose.msra.mxu0 0.0
        %1193 = vmatprep.subr.mxu0 0.0
        %1194 = vmatpush1.xpose.msra.mxu0 0.0
        %1195 = vmatprep.subr.mxu0 0.0
        %1196 = vmatpush1.xpose.msra.mxu0 0.0
        %1197 = vmatprep.subr.mxu0 0.0
        %1198 = vmatpush1.xpose.msra.mxu0 %v1171
        %1199 = vmatprep.subr.mxu0 0.0
        %1200 = vmatpush1.xpose.msra.mxu0 %v1168
        %1201 = vmatprep.subr.mxu0 0.0
        %1202 = vmatpush1.xpose.msra.mxu0 %v1165
        %1203 = vmatprep.subr.mxu0 0.0
        %1204 = vmatpush1.xpose.msra.mxu0 %v1162
        %1205 = vmatprep.subr.mxu0 0.0
        %1206 = vmatpush2.xpose.msra.mxu0 0.0
        %1207 = vmatprep.subr.mxu0 0.0
        %1208 = vmatpush2.xpose.msra.mxu0 0.0
        %1209 = vmatprep.subr.mxu0 0.0
        %1210 = vmatpush2.xpose.msra.mxu0 0.0
        %1211 = vmatprep.subr.mxu0 0.0
        %1212 = vmatpush2.xpose.msra.mxu0 0.0
        %1213 = vmatprep.subr.mxu0 0.0
        %1214 = vmatpush2.xpose.msra.mxu0 0.0
        %1215 = vmatprep.subr.mxu0 0.0
        %1216 = vmatpush2.xpose.msra.mxu0 0.0
        %1217 = vmatprep.subr.mxu0 0.0
        %1218 = vmatpush2.xpose.msra.mxu0 0.0
        %1219 = vmatprep.subr.mxu0 0.0
        %1220 = vmatpush2.xpose.msra.mxu0 0.0
        %1221 = vmatprep.subr.mxu0 0.0
        %1222 = vmatpush2.xpose.msra.mxu0 0.0
        %1223 = vmatprep.subr.mxu0 0.0
        %1224 = vmatpush2.xpose.msra.mxu0 0.0
        %1225 = vmatprep.subr.mxu0 0.0
        %1226 = vmatpush2.xpose.msra.mxu0 0.0
        %1227 = vmatprep.subr.mxu0 0.0
        %1228 = vmatpush2.xpose.msra.mxu0 0.0
        %1229 = vmatprep.subr.mxu0 0.0
        %1230 = vmatpush2.xpose.msra.mxu0 0.0
        %1231 = vmatprep.subr.mxu0 0.0
        %1232 = vmatpush2.xpose.msra.mxu0 0.0
        %1233 = vmatprep.subr.mxu0 0.0
        %1234 = vmatpush2.xpose.msra.mxu0 0.0
        %1235 = vmatprep.subr.mxu0 0.0
        %1236 = vmatpush2.xpose.msra.mxu0 0.0
        %1237 = vmatprep.mubr.f32.mxu0 0.0
        %1238 = vmatmul.mubr.f32.gmra.mxu0 %v1159
        %v1239 = vpop.f32.mrf.mxu0
        %v1240 = vadd.f32 %v1156, %v1239
        %v1241 = vpop.f32.mrf.mxu0
        %1242 = vdwg.mxu0
        %v1243 = vadd.f32 %v1240, %v315
        %v1244 = vsel %vm335, %v1243, 0.0
        %1245 = vadd.xlane.f32.xlu0 %v1244
        %v1246 = vpop.xlane.xlu0 %1245
        %v1247 = vrcp.pop 32.0
        %v1248 = vmul.f32 %v1246, %v1247
        %v1249 = vsub.f32 %v1243, %v1248
        %v1250 = vmul.f32 %v1249, %v1249
        %v1251 = vsel %vm335, %v1250, 0.0
        %1252 = vadd.xlane.f32.xlu0 %v1251
        %v1253 = vpop.xlane.xlu0 %1252
        %v1254 = vmul.f32 %v1253, %v1247
        %v1255 = vadd.f32 %v1254, 1e-12
        %v1256 = vrsqrt.pop %v1255
        %v1257 = vmul.f32 %v1249, %v1256
        %v1258 = vld [vmem:[%s6] sm:$0x1]
        %v1260 = vlaneseq
        %v1261 = vshrl.u32 %v1260, 7
        %v1262 = vsub.s32 0, %v1261
        %v1263 = vrot.slane %v1258, %v1262
        %v1265 = vmul.f32 %v1263, %v1257
        %v1266 = vld [vmem:[%s7] sm:$0x1]
        %v1268 = vlaneseq
        %v1269 = vshrl.u32 %v1268, 7
        %v1270 = vsub.s32 0, %v1269
        %v1271 = vrot.slane %v1266, %v1270
        %v1273 = vadd.f32 %v1265, %v1271
        %1274 = vst.msk [vmem:[%s307] sm:$0xff] %vm335, %v1273
        %s1275 = sand.u32 %s208, 1
        %s1276 = scalar_lea.sflag [#allocation4], %s1275
        %s1277 = sand.u32 %s208, 1
        %s1278 = smul.addr %s1277, 8
        %s1279 = scalar_lea.vmem [#allocation3], %s1278
        // Predicated region
        $region53: #{tpu_custom_call.1} parent=51 // pred_check
          %p1280 = pneg %p218
        $region54: #{tpu_custom_call.1} parent=51 // pred_check_branch
          %1282 = sbr.rel (%p1280) target = $region56
        $region55: #{tpu_custom_call.1} parent=51 // pred_region
          %s1284 = ssub.s32 128, 128
          %1285 = vsyncadd %s1276, %s1284
          %s1286 = smul.addr %s22, 128
          %s1287 = scalar_lea.hbm %s8, %s1286
          %s1289 = sshll.u32 %s1279, 4
          %s1290 = int_to_ptr.vmem [resolvable:$true] %s1289
          %1292 = dma.vmem_to_hbm [thread:$0]  %s1290, 128, %s1287, %s1276
        $region56: #{tpu_custom_call.1} parent=51 // pred_fallthru
          _
      $region52: #{tpu_custom_call.1} parent=5 // pred_fallthru
        _
      %p1293 = scmp.le.s32.totalorder 2, %s17
      // Predicated region
      $region57: #{tpu_custom_call.1} parent=5 // pred_check
        %p1294 = pneg %p1293
      $region58: #{tpu_custom_call.1} parent=5 // pred_check_branch
        %1296 = sbr.rel (%p1294) target = $region60
      $region59: #{tpu_custom_call.1} parent=5 // pred_region
        %s1297 = ssub.s32 %s17, 2
        // Predicated region
        $region61: #{tpu_custom_call.1} parent=59 // pred_check
          %p1298 = pneg %p224
        $region62: #{tpu_custom_call.1} parent=59 // pred_check_branch
          %1300 = sbr.rel (%p1298) target = $region64
        $region63: #{tpu_custom_call.1} parent=59 // pred_region
          %s1301 = sand.u32 %s209, 1
          %s1302 = scalar_lea.sflag [#allocation4], %s1301
          %s1303 = sand.u32 %s209, 1
          %s1304 = smul.addr %s1303, 8
          %s1305 = scalar_lea.vmem [#allocation3], %s1304
          %1306 = dma.done %s1302, 128
        $region64: #{tpu_custom_call.1} parent=59 // pred_fallthru
          _
      $region60: #{tpu_custom_call.1} parent=5 // pred_fallthru
        _
    $region6: #{tpu_custom_call.1} parent=1 // loop_footer
      %s21 = sadd.s32 1, %s17
    $region7: #{tpu_custom_call.1} parent=1 // loop_footer_branch
      %16 = sbr.rel target = $region3
    $region8: #{tpu_custom_call.1} parent=1 // loop_exit
      _
    %1307 = vsyncpa [#allocation4], 1
    %s1308 = scalar_lea.sflag [#allocation4], 1
    %1309 = vsyncpa %s1308, 1

</llo_original>
